<compile_context>
chip_gen: v7x
topology: tpu7x:2x2x1
jax: 0.10.0
libtpu: 0.0.40
codegen_flags: <defaults>
</compile_context>

<pallas_src>
import functools

import jax
import jax.numpy as jnp
from jax import lax
from jax.experimental import pallas as pl
from jax.experimental.pallas import tpu as pltpu


# ----------------------------- Pallas kernel ------------------------------ #
def sohlstm_kernel(xp_ref,            # (tT, bb, 4H) bf16 : x@W_ih1^T + b1 (hoisted)
                   wrec_ref,          # fused: (2H, 8H) bf16 | unfused: (2, H, 4H) bf16
                   wih2_ref,          # (H, 4H) bf16 : W_ih2^T
                   b2_ref,            # (1, 4H)  f32 : b_ih2 + b_hh2
                   fw1_ref, fb1_ref,  # (H, H//2) f32, (1, H//2) f32
                   fw2_ref, fb2_ref,  # (H//2, 1) f32, (1, 1) f32
                   out_ref,           # (bb, 1) f32
                   h1_sc, c1_sc, h2_sc, c2_sc):   # (bb, H) f32 carried state
    f32, bf16 = jnp.float32, jnp.bfloat16
    tT, bb, G = xp_ref.shape
    H = G // 4
    fused = len(wrec_ref.shape) == 2      # block-diagonal recurrent weight?
    split_act = (H % 128) == 0            # lane-aligned gate blocks?

    t_tile = pl.program_id(1)

    # --- init carried LSTM state at the first time tile of each batch block.
    @pl.when(t_tile == 0)
    def _():
        z = jnp.zeros((bb, H), f32)
        h1_sc[...] = z
        c1_sc[...] = z
        h2_sc[...] = z
        c2_sc[...] = z

    # --- hoisted weight loads / broadcasts (outside the serial time loop).
    wih2 = wih2_ref[...]
    if fused:
        wrec = wrec_ref[...]
    else:
        whh1 = wrec_ref[0]
        whh2 = wrec_ref[1]
    b2 = jnp.broadcast_to(b2_ref[...], (bb, G))

    if not split_act:
        lane = lax.broadcasted_iota(jnp.int32, (bb, G), 1)
        g_block = (lane >= 2 * H) & (lane < 3 * H)

    def activate(gates):
        if split_act:
            # Lane-aligned gate blocks: tanh only on the candidate block,
            # sigmoid on the rest (half the EUP work vs. dense + select).
            s_if = jax.nn.sigmoid(gates[:, :2 * H])
            g = jnp.tanh(gates[:, 2 * H:3 * H])
            o = jax.nn.sigmoid(gates[:, 3 * H:])
            return s_if[:, :H], s_if[:, H:], g, o
        # Sub-lane H: full-width sigmoid + tanh + one lane-mask select.
        sg = jax.nn.sigmoid(gates)
        th = jnp.tanh(gates)
        a = jnp.where(g_block, th, sg)
        return a[:, 0:H], a[:, H:2 * H], a[:, 2 * H:3 * H], a[:, 3 * H:4 * H]

    def step(t, carry):
        h1, c1, h2, c2 = carry
        # Recurrent matmuls depend only on carried state -> issued up front.
        if fused:
            hcat = jnp.concatenate([h1, h2], axis=-1).astype(bf16)    # (bb, 2H)
            rec = jnp.dot(hcat, wrec, preferred_element_type=f32)     # (bb, 8H)
            rec1, rec2 = rec[:, :G], rec[:, G:]
        else:
            rec1 = jnp.dot(h1.astype(bf16), whh1, preferred_element_type=f32)
            rec2 = jnp.dot(h2.astype(bf16), whh2, preferred_element_type=f32)

        # Layer 1: input projection precomputed (bias folded in), bf16 stream.
        i1, f1, g1, o1 = activate(xp_ref[t].astype(f32) + rec1)
        c1 = f1 * c1 + i1 * g1
        h1 = o1 * jnp.tanh(c1)

        # Layer 2 (input = this step's h1).
        gates2 = (jnp.dot(h1.astype(bf16), wih2, preferred_element_type=f32)
                  + rec2 + b2)
        i2, f2, g2, o2 = activate(gates2)
        c2 = f2 * c2 + i2 * g2
        h2 = o2 * jnp.tanh(c2)
        return (h1, c1, h2, c2)

    # Unroll factor scales with live per-step state so temporaries stay in
    # vregs (full unroll only for small tiles; 2-4 for large bb*H tiles).
    vregs_per_gate_tile = max(1, (bb * G) // (8 * 128))
    if vregs_per_gate_tile <= 4:
        unroll = tT
    elif vregs_per_gate_tile <= 16:
        unroll = min(tT, 4)
    else:
        unroll = min(tT, 2)

    carry0 = (h1_sc[...], c1_sc[...], h2_sc[...], c2_sc[...])
    h1, c1, h2, c2 = lax.fori_loop(0, tT, step, carry0, unroll=unroll)
    h1_sc[...] = h1
    c1_sc[...] = c1
    h2_sc[...] = h2
    c2_sc[...] = c2

    # fc head only at the last time tile: Linear -> LeakyReLU(0.01) -> Linear.
    @pl.when(t_tile == pl.num_programs(1) - 1)
    def _():
        z = jnp.dot(h2, fw1_ref[...], preferred_element_type=f32) + fb1_ref[...]
        z = jnp.where(z > 0, z, 0.01 * z)
        out_ref[...] = (jnp.dot(z, fw2_ref[...], preferred_element_type=f32)
                        + fb2_ref[...])


# ------------------------------ Host wrapper ------------------------------ #
def _pick_time_tile(T, max_tile=64):
    for cand in range(min(T, max_tile), 0, -1):
        if T % cand == 0:
            return cand
    return T


def sohlstm_forward(x_btI, params, *, batch_block=None, time_tile=None):
    """x_btI: (B, T, I) float32.  Returns (B,) float32 (eval-mode forward)."""
    B, T, I = x_btI.shape
    H = params["whh1T"].shape[0]
    G = 4 * H
    f32, bf16 = jnp.float32, jnp.bfloat16

    # Batch tiling: default to >= 2 blocks when B allows so the "parallel"
    # grid axis can shard across both TensorCores on v7x-class parts.
    if batch_block is None:
        bb = B // 2 if (B >= 16 and (B // 2) % 8 == 0) else B
    else:
        bb = batch_block
    assert B % bb == 0 and (bb == B or bb % 8 == 0), "bad batch_block"
    n_blocks = B // bb

    # Time tiling: stream xp in tiles; h/c live in VMEM scratch across tiles.
    tT = _pick_time_tile(T) if time_tile is None else time_tile
    assert T % tT == 0, "time_tile must divide T"
    n_t = T // tT

    # Hoisted, time-invariant input projection (layer-1 bias folded in),
    # stored as a lane-dense bf16 stream: one big MXU matmul off the serial
    # recurrence path and half the streamed bytes.
    x_tbi = jnp.transpose(x_btI, (1, 0, 2))                            # (T, B, I)
    xp = (jnp.dot(x_tbi.reshape(T * B, I).astype(bf16),
                  params["wih1T"].astype(bf16),
                  preferred_element_type=f32)
          + params["bg1"]).astype(bf16).reshape(T, B, G)               # (T, B, 4H)

    # Recurrent weights: block-diagonal fusion only when H is small (per-push
    # MXU overhead dominates); otherwise two independent matmuls per step.
    fuse_rec = H < 128
    if fuse_rec:
        zHG = jnp.zeros((H, G), f32)
        wrec = jnp.block([[params["whh1T"], zHG],
                          [zHG, params["whh2T"]]]).astype(bf16)        # (2H, 8H)
        wrec_spec = pl.BlockSpec((2 * H, 2 * G), lambda b, t: (0, 0))
    else:
        wrec = jnp.stack([params["whh1T"], params["whh2T"]], 0).astype(bf16)  # (2,H,4H)
        wrec_spec = pl.BlockSpec((2, H, G), lambda b, t: (0, 0, 0))

    wih2 = params["wih2T"].astype(bf16)

    args = (xp, wrec, wih2, params["bg2"],
            params["fw1T"], params["fb1"], params["fw2T"], params["fb2"])

    bcast = lambda b, t: (0, 0)   # weights/biases: same whole block every step
    in_specs = [
        pl.BlockSpec((tT, bb, G), lambda b, t: (t, b, 0)),   # xp: time x batch
        wrec_spec,                                           # recurrent weights
        pl.BlockSpec((H, G), bcast),                         # wih2
        pl.BlockSpec((1, G), bcast),                         # b2
        pl.BlockSpec((H, H // 2), bcast),                    # fw1
        pl.BlockSpec((1, H // 2), bcast),                    # fb1
        pl.BlockSpec((H // 2, 1), bcast),                    # fw2
        pl.BlockSpec((1, 1), bcast),                         # fb2
    ]
    out_spec = pl.BlockSpec((bb, 1), lambda b, t: (b, 0))

    out = pl.pallas_call(
        sohlstm_kernel,
        out_shape=jax.ShapeDtypeStruct((B, 1), f32),
        grid_spec=pltpu.PrefetchScalarGridSpec(
            num_scalar_prefetch=0,
            grid=(n_blocks, n_t),
            in_specs=in_specs,
            out_specs=out_spec,
            scratch_shapes=[pltpu.VMEM((bb, H), f32),   # h1
                            pltpu.VMEM((bb, H), f32),   # c1
                            pltpu.VMEM((bb, H), f32),   # h2
                            pltpu.VMEM((bb, H), f32)],  # c2
        ),
        compiler_params=pltpu.CompilerParams(
            dimension_semantics=("parallel", "arbitrary"),
        ),
    )(*args)
    return out[:, 0]


# --------------------------- Parameter creation ---------------------------- #
def init_params(key, input_size, hidden_size):
    H = hidden_size
    k = 1.0 / jnp.sqrt(jnp.float32(H))
    keys = jax.random.split(key, 12)

    def u(kk, shape):
        return jax.random.uniform(kk, shape, jnp.float32, -k, k)

    # PyTorch LSTM layout: W_ih (4H, in), W_hh (4H, H), b_ih (4H,), b_hh (4H,)
    wih1 = u(keys[0], (4 * H, input_size))
    whh1 = u(keys[1], (4 * H, H))
    bih1 = u(keys[2], (4 * H,))
    bhh1 = u(keys[3], (4 * H,))
    wih2 = u(keys[4], (4 * H, H))
    whh2 = u(keys[5], (4 * H, H))
    bih2 = u(keys[6], (4 * H,))
    bhh2 = u(keys[7], (4 * H,))
    fw1 = u(keys[8], (H // 2, H))
    fb1 = u(keys[9], (H // 2,))
    fw2 = u(keys[10], (1, H // 2))
    fb2 = u(keys[11], (1,))

    return {
        "wih1T": wih1.T, "whh1T": whh1.T,
        "bg1": (bih1 + bhh1).reshape(1, 4 * H),
        "wih2T": wih2.T, "whh2T": whh2.T,
        "bg2": (bih2 + bhh2).reshape(1, 4 * H),
        "fw1T": fw1.T, "fb1": fb1.reshape(1, H // 2),
        "fw2T": fw2.T, "fb2": fb2.reshape(1, 1),
    }


# --------------------------- Plain-JAX references --------------------------- #
def sohlstm_reference(x_btI, p, *, match_kernel=True):
    """match_kernel=True mirrors kernel numerics (bf16 operands / bf16 xp stream);
    match_kernel=False is the pure-f32 reference matching the PyTorch module."""
    B, T, I = x_btI.shape
    H = p["whh1T"].shape[0]
    G = 4 * H
    f32, bf16 = jnp.float32, jnp.bfloat16
    cast = (lambda a: a.astype(bf16)) if match_kernel else (lambda a: a)

    wih1 = cast(p["wih1T"])
    whh1 = cast(p["whh1T"])
    wih2 = cast(p["wih2T"])
    whh2 = cast(p["whh2T"])

    # Hoisted input projection (quantized to bf16 when matching the kernel).
    xp = (jnp.dot(cast(x_btI.reshape(B * T, I)), wih1,
                  preferred_element_type=f32) + p["bg1"])
    xp = cast(xp).astype(f32).reshape(B, T, G)

    def split(g):
        return (jax.nn.sigmoid(g[:, :H]), jax.nn.sigmoid(g[:, H:2 * H]),
                jnp.tanh(g[:, 2 * H:3 * H]), jax.nn.sigmoid(g[:, 3 * H:]))

    h1 = c1 = h2 = c2 = jnp.zeros((B, H), f32)
    for t in range(T):
        g1 = xp[:, t] + jnp.dot(cast(h1), whh1, preferred_element_type=f32)
        i, f, g, o = split(g1)
        c1 = f * c1 + i * g
        h1 = o * jnp.tanh(c1)

        g2 = (jnp.dot(cast(h1), wih2, preferred_element_type=f32)
              + jnp.dot(cast(h2), whh2, preferred_element_type=f32) + p["bg2"])
        i, f, g, o = split(g2)
        c2 = f * c2 + i * g
        h2 = o * jnp.tanh(c2)

    z = jnp.dot(h2, p["fw1T"], preferred_element_type=f32) + p["fb1"]
    z = jnp.where(z > 0, z, 0.01 * z)
    y = jnp.dot(z, p["fw2T"], preferred_element_type=f32) + p["fb2"]
    return y[:, 0]


def _check(out, x, params, name):
    ref_match = sohlstm_reference(x, params, match_kernel=True)
    ref_f32 = sohlstm_reference(x, params, match_kernel=False)
    assert jnp.allclose(out, ref_match, atol=2e-3, rtol=2e-3), (name, out, ref_match)
    assert jnp.allclose(out, ref_f32, atol=5e-2, rtol=5e-2), (name, out, ref_f32)


if __name__ == "__main__":
    key = jax.random.PRNGKey(0)

    # Case 1: small model -> fused block-diagonal recurrence, dense-activation
    # path, single batch block, single time tile.
    B, T, I, H = 8, 8, 4, 32
    k1, k2, key = jax.random.split(key, 3)
    x1 = jax.random.normal(k1, (B, T, I), jnp.float32)
    p1 = init_params(k2, I, H)
    out1 = jax.jit(sohlstm_forward)(x1, p1)
    jax.block_until_ready(out1)
    assert out1.shape == (B,)
    _check(out1, x1, p1, "case1")

    # Case 2: lane-aligned H -> split activations, unfused recurrent matmuls,
    # 2 batch blocks ("parallel") x 2 time tiles ("arbitrary", state in scratch).
    B2, T2, I2, H2 = 32, 16, 4, 128
    k3, k4, key = jax.random.split(key, 3)
    x2 = jax.random.normal(k3, (B2, T2, I2), jnp.float32)
    p2 = init_params(k4, I2, H2)
    fwd2 = jax.jit(functools.partial(sohlstm_forward, batch_block=16, time_tile=8))
    out2 = fwd2(x2, p2)
    jax.block_until_ready(out2)
    assert out2.shape == (B2,)
    _check(out2, x2, p2, "case2")

    print("KERNEL_OK")
</pallas_src>

<mosaic_0001>
module attributes {stable_mosaic.version = 11 : i64} {
  func.func @sohlstm_kernel(%arg0: i32, %arg1: i32, %arg2: memref<8x8x128xbf16, #tpu.memory_space<vmem>>, %arg3: memref<64x256xbf16, #tpu.memory_space<vmem>>, %arg4: memref<32x128xbf16, #tpu.memory_space<vmem>>, %arg5: memref<1x128xf32, #tpu.memory_space<vmem>>, %arg6: memref<32x16xf32, #tpu.memory_space<vmem>>, %arg7: memref<1x16xf32, #tpu.memory_space<vmem>>, %arg8: memref<16x1xf32, #tpu.memory_space<vmem>>, %arg9: memref<1x1xf32, #tpu.memory_space<vmem>>, %arg10: memref<8x1xf32, #tpu.memory_space<vmem>>, %arg11: memref<8x32xf32, #tpu.memory_space<vmem>>, %arg12: memref<8x32xf32, #tpu.memory_space<vmem>>, %arg13: memref<8x32xf32, #tpu.memory_space<vmem>>, %arg14: memref<8x32xf32, #tpu.memory_space<vmem>>) attributes {dimension_semantics = [#tpu.dimension_semantics<parallel>, #tpu.dimension_semantics<arbitrary>], iteration_bounds = array<i64: 1, 1>, scalar_prefetch = 0 : i64, scratch_operands = 4 : i64, tpu.core_type = #tpu.core_type<tc>, window_params = [{transform_indices = @transform_0, window_bounds = array<i64: 8, 8, 128>}, {pipeline_mode = #tpu.pipeline_mode<synchronous>, transform_indices = @transform_1, window_bounds = array<i64: 64, 256>}, {pipeline_mode = #tpu.pipeline_mode<synchronous>, transform_indices = @transform_2, window_bounds = array<i64: 32, 128>}, {pipeline_mode = #tpu.pipeline_mode<synchronous>, transform_indices = @transform_3, window_bounds = array<i64: 1, 128>}, {pipeline_mode = #tpu.pipeline_mode<synchronous>, transform_indices = @transform_4, window_bounds = array<i64: 32, 16>}, {pipeline_mode = #tpu.pipeline_mode<synchronous>, transform_indices = @transform_5, window_bounds = array<i64: 1, 16>}, {pipeline_mode = #tpu.pipeline_mode<synchronous>, transform_indices = @transform_6, window_bounds = array<i64: 16, 1>}, {pipeline_mode = #tpu.pipeline_mode<synchronous>, transform_indices = @transform_7, window_bounds = array<i64: 1, 1>}, {transform_indices = @transform_8, window_bounds = array<i64: 8, 1>}]} {
    %c0_i32 = arith.constant 0 : i32
    %0 = arith.cmpi eq, %arg1, %c0_i32 : i32
    %1 = arith.extui %0 : i1 to i32
    %c0_i32_0 = arith.constant 0 : i32
    %2 = arith.cmpi ne, %1, %c0_i32_0 : i32
    scf.if %2 {
      %cst_72 = arith.constant 0.000000e+00 : f32
      %393 = vector.broadcast %cst_72 : f32 to vector<8x32xf32>
      %c0_73 = arith.constant 0 : index
      %c0_74 = arith.constant 0 : index
      %394 = vector.load %arg11[%c0_73, %c0_74] : memref<8x32xf32, #tpu.memory_space<vmem>>, vector<8x32xf32>
      tpu.vector_store %arg11[%c0_73, %c0_74], %393 {strides = array<i32>} : memref<8x32xf32, #tpu.memory_space<vmem>>, vector<8x32xf32>,
      %c0_75 = arith.constant 0 : index
      %c0_76 = arith.constant 0 : index
      %395 = vector.load %arg12[%c0_75, %c0_76] : memref<8x32xf32, #tpu.memory_space<vmem>>, vector<8x32xf32>
      tpu.vector_store %arg12[%c0_75, %c0_76], %393 {strides = array<i32>} : memref<8x32xf32, #tpu.memory_space<vmem>>, vector<8x32xf32>,
      %c0_77 = arith.constant 0 : index
      %c0_78 = arith.constant 0 : index
      %396 = vector.load %arg13[%c0_77, %c0_78] : memref<8x32xf32, #tpu.memory_space<vmem>>, vector<8x32xf32>
      tpu.vector_store %arg13[%c0_77, %c0_78], %393 {strides = array<i32>} : memref<8x32xf32, #tpu.memory_space<vmem>>, vector<8x32xf32>,
      %c0_79 = arith.constant 0 : index
      %c0_80 = arith.constant 0 : index
      %397 = vector.load %arg14[%c0_79, %c0_80] : memref<8x32xf32, #tpu.memory_space<vmem>>, vector<8x32xf32>
      tpu.vector_store %arg14[%c0_79, %c0_80], %393 {strides = array<i32>} : memref<8x32xf32, #tpu.memory_space<vmem>>, vector<8x32xf32>,
    } else {
    }
    %c0 = arith.constant 0 : index
    %c0_1 = arith.constant 0 : index
    %3 = vector.load %arg4[%c0, %c0_1] : memref<32x128xbf16, #tpu.memory_space<vmem>>, vector<32x128xbf16>
    %c0_2 = arith.constant 0 : index
    %c0_3 = arith.constant 0 : index
    %4 = vector.load %arg3[%c0_2, %c0_3] : memref<64x256xbf16, #tpu.memory_space<vmem>>, vector<64x256xbf16>
    %c0_4 = arith.constant 0 : index
    %c0_5 = arith.constant 0 : index
    %5 = vector.load %arg5[%c0_4, %c0_5] : memref<1x128xf32, #tpu.memory_space<vmem>>, vector<1x128xf32>
    %6 = vector.shape_cast %5 : vector<1x128xf32> to vector<1x128xf32>
    %7 = vector.broadcast %6 : vector<1x128xf32> to vector<8x128xf32>
    %8 = tpu.iota {dimensions = array<i32: 1>} : vector<8x128xi32>
    %c64_i32 = arith.constant 64 : i32
    %9 = vector.broadcast %c64_i32 : i32 to vector<8x128xi32>
    %10 = arith.cmpi sge, %8, %9 : vector<8x128xi32>
    %c96_i32 = arith.constant 96 : i32
    %11 = vector.broadcast %c96_i32 : i32 to vector<8x128xi32>
    %12 = arith.cmpi slt, %8, %11 : vector<8x128xi32>
    %13 = arith.andi %10, %12 : vector<8x128xi1>
    %c0_6 = arith.constant 0 : index
    %c0_7 = arith.constant 0 : index
    %14 = vector.load %arg11[%c0_6, %c0_7] : memref<8x32xf32, #tpu.memory_space<vmem>>, vector<8x32xf32>
    %c0_8 = arith.constant 0 : index
    %c0_9 = arith.constant 0 : index
    %15 = vector.load %arg12[%c0_8, %c0_9] : memref<8x32xf32, #tpu.memory_space<vmem>>, vector<8x32xf32>
    %c0_10 = arith.constant 0 : index
    %c0_11 = arith.constant 0 : index
    %16 = vector.load %arg13[%c0_10, %c0_11] : memref<8x32xf32, #tpu.memory_space<vmem>>, vector<8x32xf32>
    %c0_12 = arith.constant 0 : index
    %c0_13 = arith.constant 0 : index
    %17 = vector.load %arg14[%c0_12, %c0_13] : memref<8x32xf32, #tpu.memory_space<vmem>>, vector<8x32xf32>
    %c0_i32_14 = arith.constant 0 : i32
    %18 = tpu.concatenate %14, %16 in 1 : vector<8x32xf32>, vector<8x32xf32> -> vector<8x64xf32>
    %19 = arith.truncf %18 : vector<8x64xf32> to vector<8x64xbf16>
    %cst = arith.constant dense<0.000000e+00> : vector<8x256xf32>
    %20 = tpu.matmul %19, %4, %cst {dimension_numbers = #tpu.dot_dimension_numbers<[1], [0], [0], [1], [0, 0, 1, 1], [], []>} : vector<8x64xbf16>, vector<64x256xbf16>, vector<8x256xf32> -> vector<8x256xf32>
    %21 = vector.extract_strided_slice %20 {offsets = [0, 0], sizes = [8, 128], strides = [1, 1]} : vector<8x256xf32> to vector<8x128xf32>
    %22 = vector.extract_strided_slice %20 {offsets = [0, 128], sizes = [8, 128], strides = [1, 1]} : vector<8x256xf32> to vector<8x128xf32>
    %23 = arith.index_cast %c0_i32_14 : i32 to index
    %c0_15 = arith.constant 0 : index
    %c0_16 = arith.constant 0 : index
    %24 = vector.load %arg2[%23, %c0_15, %c0_16] : memref<8x8x128xbf16, #tpu.memory_space<vmem>>, vector<1x8x128xbf16>
    %25 = vector.shape_cast %24 : vector<1x8x128xbf16> to vector<8x128xbf16>
    %26 = arith.extf %25 : vector<8x128xbf16> to vector<8x128xf32>
    %27 = arith.addf %26, %21 : vector<8x128xf32>
    %28 = arith.negf %27 : vector<8x128xf32>
    %29 = math.exp %28 : vector<8x128xf32>
    %cst_17 = arith.constant 1.000000e+00 : f32
    %30 = vector.broadcast %cst_17 : f32 to vector<8x128xf32>
    %31 = arith.addf %30, %29 : vector<8x128xf32>
    %32 = arith.divf %30, %31 : vector<8x128xf32>
    %33 = math.tanh %27 : vector<8x128xf32>
    %34 = arith.select %13, %33, %32 : vector<8x128xi1>, vector<8x128xf32>
    %35 = vector.extract_strided_slice %34 {offsets = [0, 0], sizes = [8, 32], strides = [1, 1]} : vector<8x128xf32> to vector<8x32xf32>
    %36 = vector.extract_strided_slice %34 {offsets = [0, 32], sizes = [8, 32], strides = [1, 1]} : vector<8x128xf32> to vector<8x32xf32>
    %37 = vector.extract_strided_slice %34 {offsets = [0, 64], sizes = [8, 32], strides = [1, 1]} : vector<8x128xf32> to vector<8x32xf32>
    %38 = vector.extract_strided_slice %34 {offsets = [0, 96], sizes = [8, 32], strides = [1, 1]} : vector<8x128xf32> to vector<8x32xf32>
    %39 = arith.mulf %36, %15 : vector<8x32xf32>
    %40 = arith.mulf %35, %37 : vector<8x32xf32>
    %41 = arith.addf %39, %40 : vector<8x32xf32>
    %42 = math.tanh %41 : vector<8x32xf32>
    %43 = arith.mulf %38, %42 : vector<8x32xf32>
    %44 = arith.truncf %43 : vector<8x32xf32> to vector<8x32xbf16>
    %cst_18 = arith.constant dense<0.000000e+00> : vector<8x128xf32>
    %45 = tpu.matmul %44, %3, %cst_18 {dimension_numbers = #tpu.dot_dimension_numbers<[1], [0], [0], [1], [0, 0, 1, 1], [], []>} : vector<8x32xbf16>, vector<32x128xbf16>, vector<8x128xf32> -> vector<8x128xf32>
    %46 = arith.addf %45, %22 : vector<8x128xf32>
    %47 = arith.addf %46, %7 : vector<8x128xf32>
    %48 = arith.negf %47 : vector<8x128xf32>
    %49 = math.exp %48 : vector<8x128xf32>
    %cst_19 = arith.constant 1.000000e+00 : f32
    %50 = vector.broadcast %cst_19 : f32 to vector<8x128xf32>
    %51 = arith.addf %50, %49 : vector<8x128xf32>
    %52 = arith.divf %50, %51 : vector<8x128xf32>
    %53 = math.tanh %47 : vector<8x128xf32>
    %54 = arith.select %13, %53, %52 : vector<8x128xi1>, vector<8x128xf32>
    %55 = vector.extract_strided_slice %54 {offsets = [0, 0], sizes = [8, 32], strides = [1, 1]} : vector<8x128xf32> to vector<8x32xf32>
    %56 = vector.extract_strided_slice %54 {offsets = [0, 32], sizes = [8, 32], strides = [1, 1]} : vector<8x128xf32> to vector<8x32xf32>
    %57 = vector.extract_strided_slice %54 {offsets = [0, 64], sizes = [8, 32], strides = [1, 1]} : vector<8x128xf32> to vector<8x32xf32>
    %58 = vector.extract_strided_slice %54 {offsets = [0, 96], sizes = [8, 32], strides = [1, 1]} : vector<8x128xf32> to vector<8x32xf32>
    %59 = arith.mulf %56, %17 : vector<8x32xf32>
    %60 = arith.mulf %55, %57 : vector<8x32xf32>
    %61 = arith.addf %59, %60 : vector<8x32xf32>
    %62 = math.tanh %61 : vector<8x32xf32>
    %63 = arith.mulf %58, %62 : vector<8x32xf32>
    %c1_i32 = arith.constant 1 : i32
    %64 = tpu.concatenate %43, %63 in 1 : vector<8x32xf32>, vector<8x32xf32> -> vector<8x64xf32>
    %65 = arith.truncf %64 : vector<8x64xf32> to vector<8x64xbf16>
    %cst_20 = arith.constant dense<0.000000e+00> : vector<8x256xf32>
    %66 = tpu.matmul %65, %4, %cst_20 {dimension_numbers = #tpu.dot_dimension_numbers<[1], [0], [0], [1], [0, 0, 1, 1], [], []>} : vector<8x64xbf16>, vector<64x256xbf16>, vector<8x256xf32> -> vector<8x256xf32>
    %67 = vector.extract_strided_slice %66 {offsets = [0, 0], sizes = [8, 128], strides = [1, 1]} : vector<8x256xf32> to vector<8x128xf32>
    %68 = vector.extract_strided_slice %66 {offsets = [0, 128], sizes = [8, 128], strides = [1, 1]} : vector<8x256xf32> to vector<8x128xf32>
    %69 = arith.index_cast %c1_i32 : i32 to index
    %c0_21 = arith.constant 0 : index
    %c0_22 = arith.constant 0 : index
    %70 = vector.load %arg2[%69, %c0_21, %c0_22] : memref<8x8x128xbf16, #tpu.memory_space<vmem>>, vector<1x8x128xbf16>
    %71 = vector.shape_cast %70 : vector<1x8x128xbf16> to vector<8x128xbf16>
    %72 = arith.extf %71 : vector<8x128xbf16> to vector<8x128xf32>
    %73 = arith.addf %72, %67 : vector<8x128xf32>
    %74 = arith.negf %73 : vector<8x128xf32>
    %75 = math.exp %74 : vector<8x128xf32>
    %cst_23 = arith.constant 1.000000e+00 : f32
    %76 = vector.broadcast %cst_23 : f32 to vector<8x128xf32>
    %77 = arith.addf %76, %75 : vector<8x128xf32>
    %78 = arith.divf %76, %77 : vector<8x128xf32>
    %79 = math.tanh %73 : vector<8x128xf32>
    %80 = arith.select %13, %79, %78 : vector<8x128xi1>, vector<8x128xf32>
    %81 = vector.extract_strided_slice %80 {offsets = [0, 0], sizes = [8, 32], strides = [1, 1]} : vector<8x128xf32> to vector<8x32xf32>
    %82 = vector.extract_strided_slice %80 {offsets = [0, 32], sizes = [8, 32], strides = [1, 1]} : vector<8x128xf32> to vector<8x32xf32>
    %83 = vector.extract_strided_slice %80 {offsets = [0, 64], sizes = [8, 32], strides = [1, 1]} : vector<8x128xf32> to vector<8x32xf32>
    %84 = vector.extract_strided_slice %80 {offsets = [0, 96], sizes = [8, 32], strides = [1, 1]} : vector<8x128xf32> to vector<8x32xf32>
    %85 = arith.mulf %82, %41 : vector<8x32xf32>
    %86 = arith.mulf %81, %83 : vector<8x32xf32>
    %87 = arith.addf %85, %86 : vector<8x32xf32>
    %88 = math.tanh %87 : vector<8x32xf32>
    %89 = arith.mulf %84, %88 : vector<8x32xf32>
    %90 = arith.truncf %89 : vector<8x32xf32> to vector<8x32xbf16>
    %cst_24 = arith.constant dense<0.000000e+00> : vector<8x128xf32>
    %91 = tpu.matmul %90, %3, %cst_24 {dimension_numbers = #tpu.dot_dimension_numbers<[1], [0], [0], [1], [0, 0, 1, 1], [], []>} : vector<8x32xbf16>, vector<32x128xbf16>, vector<8x128xf32> -> vector<8x128xf32>
    %92 = arith.addf %91, %68 : vector<8x128xf32>
    %93 = arith.addf %92, %7 : vector<8x128xf32>
    %94 = arith.negf %93 : vector<8x128xf32>
    %95 = math.exp %94 : vector<8x128xf32>
    %cst_25 = arith.constant 1.000000e+00 : f32
    %96 = vector.broadcast %cst_25 : f32 to vector<8x128xf32>
    %97 = arith.addf %96, %95 : vector<8x128xf32>
    %98 = arith.divf %96, %97 : vector<8x128xf32>
    %99 = math.tanh %93 : vector<8x128xf32>
    %100 = arith.select %13, %99, %98 : vector<8x128xi1>, vector<8x128xf32>
    %101 = vector.extract_strided_slice %100 {offsets = [0, 0], sizes = [8, 32], strides = [1, 1]} : vector<8x128xf32> to vector<8x32xf32>
    %102 = vector.extract_strided_slice %100 {offsets = [0, 32], sizes = [8, 32], strides = [1, 1]} : vector<8x128xf32> to vector<8x32xf32>
    %103 = vector.extract_strided_slice %100 {offsets = [0, 64], sizes = [8, 32], strides = [1, 1]} : vector<8x128xf32> to vector<8x32xf32>
    %104 = vector.extract_strided_slice %100 {offsets = [0, 96], sizes = [8, 32], strides = [1, 1]} : vector<8x128xf32> to vector<8x32xf32>
    %105 = arith.mulf %102, %61 : vector<8x32xf32>
    %106 = arith.mulf %101, %103 : vector<8x32xf32>
    %107 = arith.addf %105, %106 : vector<8x32xf32>
    %108 = math.tanh %107 : vector<8x32xf32>
    %109 = arith.mulf %104, %108 : vector<8x32xf32>
    %c2_i32 = arith.constant 2 : i32
    %110 = tpu.concatenate %89, %109 in 1 : vector<8x32xf32>, vector<8x32xf32> -> vector<8x64xf32>
    %111 = arith.truncf %110 : vector<8x64xf32> to vector<8x64xbf16>
    %cst_26 = arith.constant dense<0.000000e+00> : vector<8x256xf32>
    %112 = tpu.matmul %111, %4, %cst_26 {dimension_numbers = #tpu.dot_dimension_numbers<[1], [0], [0], [1], [0, 0, 1, 1], [], []>} : vector<8x64xbf16>, vector<64x256xbf16>, vector<8x256xf32> -> vector<8x256xf32>
    %113 = vector.extract_strided_slice %112 {offsets = [0, 0], sizes = [8, 128], strides = [1, 1]} : vector<8x256xf32> to vector<8x128xf32>
    %114 = vector.extract_strided_slice %112 {offsets = [0, 128], sizes = [8, 128], strides = [1, 1]} : vector<8x256xf32> to vector<8x128xf32>
    %115 = arith.index_cast %c2_i32 : i32 to index
    %c0_27 = arith.constant 0 : index
    %c0_28 = arith.constant 0 : index
    %116 = vector.load %arg2[%115, %c0_27, %c0_28] : memref<8x8x128xbf16, #tpu.memory_space<vmem>>, vector<1x8x128xbf16>
    %117 = vector.shape_cast %116 : vector<1x8x128xbf16> to vector<8x128xbf16>
    %118 = arith.extf %117 : vector<8x128xbf16> to vector<8x128xf32>
    %119 = arith.addf %118, %113 : vector<8x128xf32>
    %120 = arith.negf %119 : vector<8x128xf32>
    %121 = math.exp %120 : vector<8x128xf32>
    %cst_29 = arith.constant 1.000000e+00 : f32
    %122 = vector.broadcast %cst_29 : f32 to vector<8x128xf32>
    %123 = arith.addf %122, %121 : vector<8x128xf32>
    %124 = arith.divf %122, %123 : vector<8x128xf32>
    %125 = math.tanh %119 : vector<8x128xf32>
    %126 = arith.select %13, %125, %124 : vector<8x128xi1>, vector<8x128xf32>
    %127 = vector.extract_strided_slice %126 {offsets = [0, 0], sizes = [8, 32], strides = [1, 1]} : vector<8x128xf32> to vector<8x32xf32>
    %128 = vector.extract_strided_slice %126 {offsets = [0, 32], sizes = [8, 32], strides = [1, 1]} : vector<8x128xf32> to vector<8x32xf32>
    %129 = vector.extract_strided_slice %126 {offsets = [0, 64], sizes = [8, 32], strides = [1, 1]} : vector<8x128xf32> to vector<8x32xf32>
    %130 = vector.extract_strided_slice %126 {offsets = [0, 96], sizes = [8, 32], strides = [1, 1]} : vector<8x128xf32> to vector<8x32xf32>
    %131 = arith.mulf %128, %87 : vector<8x32xf32>
    %132 = arith.mulf %127, %129 : vector<8x32xf32>
    %133 = arith.addf %131, %132 : vector<8x32xf32>
    %134 = math.tanh %133 : vector<8x32xf32>
    %135 = arith.mulf %130, %134 : vector<8x32xf32>
    %136 = arith.truncf %135 : vector<8x32xf32> to vector<8x32xbf16>
    %cst_30 = arith.constant dense<0.000000e+00> : vector<8x128xf32>
    %137 = tpu.matmul %136, %3, %cst_30 {dimension_numbers = #tpu.dot_dimension_numbers<[1], [0], [0], [1], [0, 0, 1, 1], [], []>} : vector<8x32xbf16>, vector<32x128xbf16>, vector<8x128xf32> -> vector<8x128xf32>
    %138 = arith.addf %137, %114 : vector<8x128xf32>
    %139 = arith.addf %138, %7 : vector<8x128xf32>
    %140 = arith.negf %139 : vector<8x128xf32>
    %141 = math.exp %140 : vector<8x128xf32>
    %cst_31 = arith.constant 1.000000e+00 : f32
    %142 = vector.broadcast %cst_31 : f32 to vector<8x128xf32>
    %143 = arith.addf %142, %141 : vector<8x128xf32>
    %144 = arith.divf %142, %143 : vector<8x128xf32>
    %145 = math.tanh %139 : vector<8x128xf32>
    %146 = arith.select %13, %145, %144 : vector<8x128xi1>, vector<8x128xf32>
    %147 = vector.extract_strided_slice %146 {offsets = [0, 0], sizes = [8, 32], strides = [1, 1]} : vector<8x128xf32> to vector<8x32xf32>
    %148 = vector.extract_strided_slice %146 {offsets = [0, 32], sizes = [8, 32], strides = [1, 1]} : vector<8x128xf32> to vector<8x32xf32>
    %149 = vector.extract_strided_slice %146 {offsets = [0, 64], sizes = [8, 32], strides = [1, 1]} : vector<8x128xf32> to vector<8x32xf32>
    %150 = vector.extract_strided_slice %146 {offsets = [0, 96], sizes = [8, 32], strides = [1, 1]} : vector<8x128xf32> to vector<8x32xf32>
    %151 = arith.mulf %148, %107 : vector<8x32xf32>
    %152 = arith.mulf %147, %149 : vector<8x32xf32>
    %153 = arith.addf %151, %152 : vector<8x32xf32>
    %154 = math.tanh %153 : vector<8x32xf32>
    %155 = arith.mulf %150, %154 : vector<8x32xf32>
    %c3_i32 = arith.constant 3 : i32
    %156 = tpu.concatenate %135, %155 in 1 : vector<8x32xf32>, vector<8x32xf32> -> vector<8x64xf32>
    %157 = arith.truncf %156 : vector<8x64xf32> to vector<8x64xbf16>
    %cst_32 = arith.constant dense<0.000000e+00> : vector<8x256xf32>
    %158 = tpu.matmul %157, %4, %cst_32 {dimension_numbers = #tpu.dot_dimension_numbers<[1], [0], [0], [1], [0, 0, 1, 1], [], []>} : vector<8x64xbf16>, vector<64x256xbf16>, vector<8x256xf32> -> vector<8x256xf32>
    %159 = vector.extract_strided_slice %158 {offsets = [0, 0], sizes = [8, 128], strides = [1, 1]} : vector<8x256xf32> to vector<8x128xf32>
    %160 = vector.extract_strided_slice %158 {offsets = [0, 128], sizes = [8, 128], strides = [1, 1]} : vector<8x256xf32> to vector<8x128xf32>
    %161 = arith.index_cast %c3_i32 : i32 to index
    %c0_33 = arith.constant 0 : index
    %c0_34 = arith.constant 0 : index
    %162 = vector.load %arg2[%161, %c0_33, %c0_34] : memref<8x8x128xbf16, #tpu.memory_space<vmem>>, vector<1x8x128xbf16>
    %163 = vector.shape_cast %162 : vector<1x8x128xbf16> to vector<8x128xbf16>
    %164 = arith.extf %163 : vector<8x128xbf16> to vector<8x128xf32>
    %165 = arith.addf %164, %159 : vector<8x128xf32>
    %166 = arith.negf %165 : vector<8x128xf32>
    %167 = math.exp %166 : vector<8x128xf32>
    %cst_35 = arith.constant 1.000000e+00 : f32
    %168 = vector.broadcast %cst_35 : f32 to vector<8x128xf32>
    %169 = arith.addf %168, %167 : vector<8x128xf32>
    %170 = arith.divf %168, %169 : vector<8x128xf32>
    %171 = math.tanh %165 : vector<8x128xf32>
    %172 = arith.select %13, %171, %170 : vector<8x128xi1>, vector<8x128xf32>
    %173 = vector.extract_strided_slice %172 {offsets = [0, 0], sizes = [8, 32], strides = [1, 1]} : vector<8x128xf32> to vector<8x32xf32>
    %174 = vector.extract_strided_slice %172 {offsets = [0, 32], sizes = [8, 32], strides = [1, 1]} : vector<8x128xf32> to vector<8x32xf32>
    %175 = vector.extract_strided_slice %172 {offsets = [0, 64], sizes = [8, 32], strides = [1, 1]} : vector<8x128xf32> to vector<8x32xf32>
    %176 = vector.extract_strided_slice %172 {offsets = [0, 96], sizes = [8, 32], strides = [1, 1]} : vector<8x128xf32> to vector<8x32xf32>
    %177 = arith.mulf %174, %133 : vector<8x32xf32>
    %178 = arith.mulf %173, %175 : vector<8x32xf32>
    %179 = arith.addf %177, %178 : vector<8x32xf32>
    %180 = math.tanh %179 : vector<8x32xf32>
    %181 = arith.mulf %176, %180 : vector<8x32xf32>
    %182 = arith.truncf %181 : vector<8x32xf32> to vector<8x32xbf16>
    %cst_36 = arith.constant dense<0.000000e+00> : vector<8x128xf32>
    %183 = tpu.matmul %182, %3, %cst_36 {dimension_numbers = #tpu.dot_dimension_numbers<[1], [0], [0], [1], [0, 0, 1, 1], [], []>} : vector<8x32xbf16>, vector<32x128xbf16>, vector<8x128xf32> -> vector<8x128xf32>
    %184 = arith.addf %183, %160 : vector<8x128xf32>
    %185 = arith.addf %184, %7 : vector<8x128xf32>
    %186 = arith.negf %185 : vector<8x128xf32>
    %187 = math.exp %186 : vector<8x128xf32>
    %cst_37 = arith.constant 1.000000e+00 : f32
    %188 = vector.broadcast %cst_37 : f32 to vector<8x128xf32>
    %189 = arith.addf %188, %187 : vector<8x128xf32>
    %190 = arith.divf %188, %189 : vector<8x128xf32>
    %191 = math.tanh %185 : vector<8x128xf32>
    %192 = arith.select %13, %191, %190 : vector<8x128xi1>, vector<8x128xf32>
    %193 = vector.extract_strided_slice %192 {offsets = [0, 0], sizes = [8, 32], strides = [1, 1]} : vector<8x128xf32> to vector<8x32xf32>
    %194 = vector.extract_strided_slice %192 {offsets = [0, 32], sizes = [8, 32], strides = [1, 1]} : vector<8x128xf32> to vector<8x32xf32>
    %195 = vector.extract_strided_slice %192 {offsets = [0, 64], sizes = [8, 32], strides = [1, 1]} : vector<8x128xf32> to vector<8x32xf32>
    %196 = vector.extract_strided_slice %192 {offsets = [0, 96], sizes = [8, 32], strides = [1, 1]} : vector<8x128xf32> to vector<8x32xf32>
    %197 = arith.mulf %194, %153 : vector<8x32xf32>
    %198 = arith.mulf %193, %195 : vector<8x32xf32>
    %199 = arith.addf %197, %198 : vector<8x32xf32>
    %200 = math.tanh %199 : vector<8x32xf32>
    %201 = arith.mulf %196, %200 : vector<8x32xf32>
    %c4_i32 = arith.constant 4 : i32
    %202 = tpu.concatenate %181, %201 in 1 : vector<8x32xf32>, vector<8x32xf32> -> vector<8x64xf32>
    %203 = arith.truncf %202 : vector<8x64xf32> to vector<8x64xbf16>
    %cst_38 = arith.constant dense<0.000000e+00> : vector<8x256xf32>
    %204 = tpu.matmul %203, %4, %cst_38 {dimension_numbers = #tpu.dot_dimension_numbers<[1], [0], [0], [1], [0, 0, 1, 1], [], []>} : vector<8x64xbf16>, vector<64x256xbf16>, vector<8x256xf32> -> vector<8x256xf32>
    %205 = vector.extract_strided_slice %204 {offsets = [0, 0], sizes = [8, 128], strides = [1, 1]} : vector<8x256xf32> to vector<8x128xf32>
    %206 = vector.extract_strided_slice %204 {offsets = [0, 128], sizes = [8, 128], strides = [1, 1]} : vector<8x256xf32> to vector<8x128xf32>
    %207 = arith.index_cast %c4_i32 : i32 to index
    %c0_39 = arith.constant 0 : index
    %c0_40 = arith.constant 0 : index
    %208 = vector.load %arg2[%207, %c0_39, %c0_40] : memref<8x8x128xbf16, #tpu.memory_space<vmem>>, vector<1x8x128xbf16>
    %209 = vector.shape_cast %208 : vector<1x8x128xbf16> to vector<8x128xbf16>
    %210 = arith.extf %209 : vector<8x128xbf16> to vector<8x128xf32>
    %211 = arith.addf %210, %205 : vector<8x128xf32>
    %212 = arith.negf %211 : vector<8x128xf32>
    %213 = math.exp %212 : vector<8x128xf32>
    %cst_41 = arith.constant 1.000000e+00 : f32
    %214 = vector.broadcast %cst_41 : f32 to vector<8x128xf32>
    %215 = arith.addf %214, %213 : vector<8x128xf32>
    %216 = arith.divf %214, %215 : vector<8x128xf32>
    %217 = math.tanh %211 : vector<8x128xf32>
    %218 = arith.select %13, %217, %216 : vector<8x128xi1>, vector<8x128xf32>
    %219 = vector.extract_strided_slice %218 {offsets = [0, 0], sizes = [8, 32], strides = [1, 1]} : vector<8x128xf32> to vector<8x32xf32>
    %220 = vector.extract_strided_slice %218 {offsets = [0, 32], sizes = [8, 32], strides = [1, 1]} : vector<8x128xf32> to vector<8x32xf32>
    %221 = vector.extract_strided_slice %218 {offsets = [0, 64], sizes = [8, 32], strides = [1, 1]} : vector<8x128xf32> to vector<8x32xf32>
    %222 = vector.extract_strided_slice %218 {offsets = [0, 96], sizes = [8, 32], strides = [1, 1]} : vector<8x128xf32> to vector<8x32xf32>
    %223 = arith.mulf %220, %179 : vector<8x32xf32>
    %224 = arith.mulf %219, %221 : vector<8x32xf32>
    %225 = arith.addf %223, %224 : vector<8x32xf32>
    %226 = math.tanh %225 : vector<8x32xf32>
    %227 = arith.mulf %222, %226 : vector<8x32xf32>
    %228 = arith.truncf %227 : vector<8x32xf32> to vector<8x32xbf16>
    %cst_42 = arith.constant dense<0.000000e+00> : vector<8x128xf32>
    %229 = tpu.matmul %228, %3, %cst_42 {dimension_numbers = #tpu.dot_dimension_numbers<[1], [0], [0], [1], [0, 0, 1, 1], [], []>} : vector<8x32xbf16>, vector<32x128xbf16>, vector<8x128xf32> -> vector<8x128xf32>
    %230 = arith.addf %229, %206 : vector<8x128xf32>
    %231 = arith.addf %230, %7 : vector<8x128xf32>
    %232 = arith.negf %231 : vector<8x128xf32>
    %233 = math.exp %232 : vector<8x128xf32>
    %cst_43 = arith.constant 1.000000e+00 : f32
    %234 = vector.broadcast %cst_43 : f32 to vector<8x128xf32>
    %235 = arith.addf %234, %233 : vector<8x128xf32>
    %236 = arith.divf %234, %235 : vector<8x128xf32>
    %237 = math.tanh %231 : vector<8x128xf32>
    %238 = arith.select %13, %237, %236 : vector<8x128xi1>, vector<8x128xf32>
    %239 = vector.extract_strided_slice %238 {offsets = [0, 0], sizes = [8, 32], strides = [1, 1]} : vector<8x128xf32> to vector<8x32xf32>
    %240 = vector.extract_strided_slice %238 {offsets = [0, 32], sizes = [8, 32], strides = [1, 1]} : vector<8x128xf32> to vector<8x32xf32>
    %241 = vector.extract_strided_slice %238 {offsets = [0, 64], sizes = [8, 32], strides = [1, 1]} : vector<8x128xf32> to vector<8x32xf32>
    %242 = vector.extract_strided_slice %238 {offsets = [0, 96], sizes = [8, 32], strides = [1, 1]} : vector<8x128xf32> to vector<8x32xf32>
    %243 = arith.mulf %240, %199 : vector<8x32xf32>
    %244 = arith.mulf %239, %241 : vector<8x32xf32>
    %245 = arith.addf %243, %244 : vector<8x32xf32>
    %246 = math.tanh %245 : vector<8x32xf32>
    %247 = arith.mulf %242, %246 : vector<8x32xf32>
    %c5_i32 = arith.constant 5 : i32
    %248 = tpu.concatenate %227, %247 in 1 : vector<8x32xf32>, vector<8x32xf32> -> vector<8x64xf32>
    %249 = arith.truncf %248 : vector<8x64xf32> to vector<8x64xbf16>
    %cst_44 = arith.constant dense<0.000000e+00> : vector<8x256xf32>
    %250 = tpu.matmul %249, %4, %cst_44 {dimension_numbers = #tpu.dot_dimension_numbers<[1], [0], [0], [1], [0, 0, 1, 1], [], []>} : vector<8x64xbf16>, vector<64x256xbf16>, vector<8x256xf32> -> vector<8x256xf32>
    %251 = vector.extract_strided_slice %250 {offsets = [0, 0], sizes = [8, 128], strides = [1, 1]} : vector<8x256xf32> to vector<8x128xf32>
    %252 = vector.extract_strided_slice %250 {offsets = [0, 128], sizes = [8, 128], strides = [1, 1]} : vector<8x256xf32> to vector<8x128xf32>
    %253 = arith.index_cast %c5_i32 : i32 to index
    %c0_45 = arith.constant 0 : index
    %c0_46 = arith.constant 0 : index
    %254 = vector.load %arg2[%253, %c0_45, %c0_46] : memref<8x8x128xbf16, #tpu.memory_space<vmem>>, vector<1x8x128xbf16>
    %255 = vector.shape_cast %254 : vector<1x8x128xbf16> to vector<8x128xbf16>
    %256 = arith.extf %255 : vector<8x128xbf16> to vector<8x128xf32>
    %257 = arith.addf %256, %251 : vector<8x128xf32>
    %258 = arith.negf %257 : vector<8x128xf32>
    %259 = math.exp %258 : vector<8x128xf32>
    %cst_47 = arith.constant 1.000000e+00 : f32
    %260 = vector.broadcast %cst_47 : f32 to vector<8x128xf32>
    %261 = arith.addf %260, %259 : vector<8x128xf32>
    %262 = arith.divf %260, %261 : vector<8x128xf32>
    %263 = math.tanh %257 : vector<8x128xf32>
    %264 = arith.select %13, %263, %262 : vector<8x128xi1>, vector<8x128xf32>
    %265 = vector.extract_strided_slice %264 {offsets = [0, 0], sizes = [8, 32], strides = [1, 1]} : vector<8x128xf32> to vector<8x32xf32>
    %266 = vector.extract_strided_slice %264 {offsets = [0, 32], sizes = [8, 32], strides = [1, 1]} : vector<8x128xf32> to vector<8x32xf32>
    %267 = vector.extract_strided_slice %264 {offsets = [0, 64], sizes = [8, 32], strides = [1, 1]} : vector<8x128xf32> to vector<8x32xf32>
    %268 = vector.extract_strided_slice %264 {offsets = [0, 96], sizes = [8, 32], strides = [1, 1]} : vector<8x128xf32> to vector<8x32xf32>
    %269 = arith.mulf %266, %225 : vector<8x32xf32>
    %270 = arith.mulf %265, %267 : vector<8x32xf32>
    %271 = arith.addf %269, %270 : vector<8x32xf32>
    %272 = math.tanh %271 : vector<8x32xf32>
    %273 = arith.mulf %268, %272 : vector<8x32xf32>
    %274 = arith.truncf %273 : vector<8x32xf32> to vector<8x32xbf16>
    %cst_48 = arith.constant dense<0.000000e+00> : vector<8x128xf32>
    %275 = tpu.matmul %274, %3, %cst_48 {dimension_numbers = #tpu.dot_dimension_numbers<[1], [0], [0], [1], [0, 0, 1, 1], [], []>} : vector<8x32xbf16>, vector<32x128xbf16>, vector<8x128xf32> -> vector<8x128xf32>
    %276 = arith.addf %275, %252 : vector<8x128xf32>
    %277 = arith.addf %276, %7 : vector<8x128xf32>
    %278 = arith.negf %277 : vector<8x128xf32>
    %279 = math.exp %278 : vector<8x128xf32>
    %cst_49 = arith.constant 1.000000e+00 : f32
    %280 = vector.broadcast %cst_49 : f32 to vector<8x128xf32>
    %281 = arith.addf %280, %279 : vector<8x128xf32>
    %282 = arith.divf %280, %281 : vector<8x128xf32>
    %283 = math.tanh %277 : vector<8x128xf32>
    %284 = arith.select %13, %283, %282 : vector<8x128xi1>, vector<8x128xf32>
    %285 = vector.extract_strided_slice %284 {offsets = [0, 0], sizes = [8, 32], strides = [1, 1]} : vector<8x128xf32> to vector<8x32xf32>
    %286 = vector.extract_strided_slice %284 {offsets = [0, 32], sizes = [8, 32], strides = [1, 1]} : vector<8x128xf32> to vector<8x32xf32>
    %287 = vector.extract_strided_slice %284 {offsets = [0, 64], sizes = [8, 32], strides = [1, 1]} : vector<8x128xf32> to vector<8x32xf32>
    %288 = vector.extract_strided_slice %284 {offsets = [0, 96], sizes = [8, 32], strides = [1, 1]} : vector<8x128xf32> to vector<8x32xf32>
    %289 = arith.mulf %286, %245 : vector<8x32xf32>
    %290 = arith.mulf %285, %287 : vector<8x32xf32>
    %291 = arith.addf %289, %290 : vector<8x32xf32>
    %292 = math.tanh %291 : vector<8x32xf32>
    %293 = arith.mulf %288, %292 : vector<8x32xf32>
    %c6_i32 = arith.constant 6 : i32
    %294 = tpu.concatenate %273, %293 in 1 : vector<8x32xf32>, vector<8x32xf32> -> vector<8x64xf32>
    %295 = arith.truncf %294 : vector<8x64xf32> to vector<8x64xbf16>
    %cst_50 = arith.constant dense<0.000000e+00> : vector<8x256xf32>
    %296 = tpu.matmul %295, %4, %cst_50 {dimension_numbers = #tpu.dot_dimension_numbers<[1], [0], [0], [1], [0, 0, 1, 1], [], []>} : vector<8x64xbf16>, vector<64x256xbf16>, vector<8x256xf32> -> vector<8x256xf32>
    %297 = vector.extract_strided_slice %296 {offsets = [0, 0], sizes = [8, 128], strides = [1, 1]} : vector<8x256xf32> to vector<8x128xf32>
    %298 = vector.extract_strided_slice %296 {offsets = [0, 128], sizes = [8, 128], strides = [1, 1]} : vector<8x256xf32> to vector<8x128xf32>
    %299 = arith.index_cast %c6_i32 : i32 to index
    %c0_51 = arith.constant 0 : index
    %c0_52 = arith.constant 0 : index
    %300 = vector.load %arg2[%299, %c0_51, %c0_52] : memref<8x8x128xbf16, #tpu.memory_space<vmem>>, vector<1x8x128xbf16>
    %301 = vector.shape_cast %300 : vector<1x8x128xbf16> to vector<8x128xbf16>
    %302 = arith.extf %301 : vector<8x128xbf16> to vector<8x128xf32>
    %303 = arith.addf %302, %297 : vector<8x128xf32>
    %304 = arith.negf %303 : vector<8x128xf32>
    %305 = math.exp %304 : vector<8x128xf32>
    %cst_53 = arith.constant 1.000000e+00 : f32
    %306 = vector.broadcast %cst_53 : f32 to vector<8x128xf32>
    %307 = arith.addf %306, %305 : vector<8x128xf32>
    %308 = arith.divf %306, %307 : vector<8x128xf32>
    %309 = math.tanh %303 : vector<8x128xf32>
    %310 = arith.select %13, %309, %308 : vector<8x128xi1>, vector<8x128xf32>
    %311 = vector.extract_strided_slice %310 {offsets = [0, 0], sizes = [8, 32], strides = [1, 1]} : vector<8x128xf32> to vector<8x32xf32>
    %312 = vector.extract_strided_slice %310 {offsets = [0, 32], sizes = [8, 32], strides = [1, 1]} : vector<8x128xf32> to vector<8x32xf32>
    %313 = vector.extract_strided_slice %310 {offsets = [0, 64], sizes = [8, 32], strides = [1, 1]} : vector<8x128xf32> to vector<8x32xf32>
    %314 = vector.extract_strided_slice %310 {offsets = [0, 96], sizes = [8, 32], strides = [1, 1]} : vector<8x128xf32> to vector<8x32xf32>
    %315 = arith.mulf %312, %271 : vector<8x32xf32>
    %316 = arith.mulf %311, %313 : vector<8x32xf32>
    %317 = arith.addf %315, %316 : vector<8x32xf32>
    %318 = math.tanh %317 : vector<8x32xf32>
    %319 = arith.mulf %314, %318 : vector<8x32xf32>
    %320 = arith.truncf %319 : vector<8x32xf32> to vector<8x32xbf16>
    %cst_54 = arith.constant dense<0.000000e+00> : vector<8x128xf32>
    %321 = tpu.matmul %320, %3, %cst_54 {dimension_numbers = #tpu.dot_dimension_numbers<[1], [0], [0], [1], [0, 0, 1, 1], [], []>} : vector<8x32xbf16>, vector<32x128xbf16>, vector<8x128xf32> -> vector<8x128xf32>
    %322 = arith.addf %321, %298 : vector<8x128xf32>
    %323 = arith.addf %322, %7 : vector<8x128xf32>
    %324 = arith.negf %323 : vector<8x128xf32>
    %325 = math.exp %324 : vector<8x128xf32>
    %cst_55 = arith.constant 1.000000e+00 : f32
    %326 = vector.broadcast %cst_55 : f32 to vector<8x128xf32>
    %327 = arith.addf %326, %325 : vector<8x128xf32>
    %328 = arith.divf %326, %327 : vector<8x128xf32>
    %329 = math.tanh %323 : vector<8x128xf32>
    %330 = arith.select %13, %329, %328 : vector<8x128xi1>, vector<8x128xf32>
    %331 = vector.extract_strided_slice %330 {offsets = [0, 0], sizes = [8, 32], strides = [1, 1]} : vector<8x128xf32> to vector<8x32xf32>
    %332 = vector.extract_strided_slice %330 {offsets = [0, 32], sizes = [8, 32], strides = [1, 1]} : vector<8x128xf32> to vector<8x32xf32>
    %333 = vector.extract_strided_slice %330 {offsets = [0, 64], sizes = [8, 32], strides = [1, 1]} : vector<8x128xf32> to vector<8x32xf32>
    %334 = vector.extract_strided_slice %330 {offsets = [0, 96], sizes = [8, 32], strides = [1, 1]} : vector<8x128xf32> to vector<8x32xf32>
    %335 = arith.mulf %332, %291 : vector<8x32xf32>
    %336 = arith.mulf %331, %333 : vector<8x32xf32>
    %337 = arith.addf %335, %336 : vector<8x32xf32>
    %338 = math.tanh %337 : vector<8x32xf32>
    %339 = arith.mulf %334, %338 : vector<8x32xf32>
    %c7_i32 = arith.constant 7 : i32
    %340 = tpu.concatenate %319, %339 in 1 : vector<8x32xf32>, vector<8x32xf32> -> vector<8x64xf32>
    %341 = arith.truncf %340 : vector<8x64xf32> to vector<8x64xbf16>
    %cst_56 = arith.constant dense<0.000000e+00> : vector<8x256xf32>
    %342 = tpu.matmul %341, %4, %cst_56 {dimension_numbers = #tpu.dot_dimension_numbers<[1], [0], [0], [1], [0, 0, 1, 1], [], []>} : vector<8x64xbf16>, vector<64x256xbf16>, vector<8x256xf32> -> vector<8x256xf32>
    %343 = vector.extract_strided_slice %342 {offsets = [0, 0], sizes = [8, 128], strides = [1, 1]} : vector<8x256xf32> to vector<8x128xf32>
    %344 = vector.extract_strided_slice %342 {offsets = [0, 128], sizes = [8, 128], strides = [1, 1]} : vector<8x256xf32> to vector<8x128xf32>
    %345 = arith.index_cast %c7_i32 : i32 to index
    %c0_57 = arith.constant 0 : index
    %c0_58 = arith.constant 0 : index
    %346 = vector.load %arg2[%345, %c0_57, %c0_58] : memref<8x8x128xbf16, #tpu.memory_space<vmem>>, vector<1x8x128xbf16>
    %347 = vector.shape_cast %346 : vector<1x8x128xbf16> to vector<8x128xbf16>
    %348 = arith.extf %347 : vector<8x128xbf16> to vector<8x128xf32>
    %349 = arith.addf %348, %343 : vector<8x128xf32>
    %350 = arith.negf %349 : vector<8x128xf32>
    %351 = math.exp %350 : vector<8x128xf32>
    %cst_59 = arith.constant 1.000000e+00 : f32
    %352 = vector.broadcast %cst_59 : f32 to vector<8x128xf32>
    %353 = arith.addf %352, %351 : vector<8x128xf32>
    %354 = arith.divf %352, %353 : vector<8x128xf32>
    %355 = math.tanh %349 : vector<8x128xf32>
    %356 = arith.select %13, %355, %354 : vector<8x128xi1>, vector<8x128xf32>
    %357 = vector.extract_strided_slice %356 {offsets = [0, 0], sizes = [8, 32], strides = [1, 1]} : vector<8x128xf32> to vector<8x32xf32>
    %358 = vector.extract_strided_slice %356 {offsets = [0, 32], sizes = [8, 32], strides = [1, 1]} : vector<8x128xf32> to vector<8x32xf32>
    %359 = vector.extract_strided_slice %356 {offsets = [0, 64], sizes = [8, 32], strides = [1, 1]} : vector<8x128xf32> to vector<8x32xf32>
    %360 = vector.extract_strided_slice %356 {offsets = [0, 96], sizes = [8, 32], strides = [1, 1]} : vector<8x128xf32> to vector<8x32xf32>
    %361 = arith.mulf %358, %317 : vector<8x32xf32>
    %362 = arith.mulf %357, %359 : vector<8x32xf32>
    %363 = arith.addf %361, %362 : vector<8x32xf32>
    %364 = math.tanh %363 : vector<8x32xf32>
    %365 = arith.mulf %360, %364 : vector<8x32xf32>
    %366 = arith.truncf %365 : vector<8x32xf32> to vector<8x32xbf16>
    %cst_60 = arith.constant dense<0.000000e+00> : vector<8x128xf32>
    %367 = tpu.matmul %366, %3, %cst_60 {dimension_numbers = #tpu.dot_dimension_numbers<[1], [0], [0], [1], [0, 0, 1, 1], [], []>} : vector<8x32xbf16>, vector<32x128xbf16>, vector<8x128xf32> -> vector<8x128xf32>
    %368 = arith.addf %367, %344 : vector<8x128xf32>
    %369 = arith.addf %368, %7 : vector<8x128xf32>
    %370 = arith.negf %369 : vector<8x128xf32>
    %371 = math.exp %370 : vector<8x128xf32>
    %cst_61 = arith.constant 1.000000e+00 : f32
    %372 = vector.broadcast %cst_61 : f32 to vector<8x128xf32>
    %373 = arith.addf %372, %371 : vector<8x128xf32>
    %374 = arith.divf %372, %373 : vector<8x128xf32>
    %375 = math.tanh %369 : vector<8x128xf32>
    %376 = arith.select %13, %375, %374 : vector<8x128xi1>, vector<8x128xf32>
    %377 = vector.extract_strided_slice %376 {offsets = [0, 0], sizes = [8, 32], strides = [1, 1]} : vector<8x128xf32> to vector<8x32xf32>
    %378 = vector.extract_strided_slice %376 {offsets = [0, 32], sizes = [8, 32], strides = [1, 1]} : vector<8x128xf32> to vector<8x32xf32>
    %379 = vector.extract_strided_slice %376 {offsets = [0, 64], sizes = [8, 32], strides = [1, 1]} : vector<8x128xf32> to vector<8x32xf32>
    %380 = vector.extract_strided_slice %376 {offsets = [0, 96], sizes = [8, 32], strides = [1, 1]} : vector<8x128xf32> to vector<8x32xf32>
    %381 = arith.mulf %378, %337 : vector<8x32xf32>
    %382 = arith.mulf %377, %379 : vector<8x32xf32>
    %383 = arith.addf %381, %382 : vector<8x32xf32>
    %384 = math.tanh %383 : vector<8x32xf32>
    %385 = arith.mulf %380, %384 : vector<8x32xf32>
    %c8_i32 = arith.constant 8 : i32
    %c0_62 = arith.constant 0 : index
    %c0_63 = arith.constant 0 : index
    %386 = vector.load %arg11[%c0_62, %c0_63] : memref<8x32xf32, #tpu.memory_space<vmem>>, vector<8x32xf32>
    tpu.vector_store %arg11[%c0_62, %c0_63], %365 {strides = array<i32>} : memref<8x32xf32, #tpu.memory_space<vmem>>, vector<8x32xf32>,
    %c0_64 = arith.constant 0 : index
    %c0_65 = arith.constant 0 : index
    %387 = vector.load %arg12[%c0_64, %c0_65] : memref<8x32xf32, #tpu.memory_space<vmem>>, vector<8x32xf32>
    tpu.vector_store %arg12[%c0_64, %c0_65], %363 {strides = array<i32>} : memref<8x32xf32, #tpu.memory_space<vmem>>, vector<8x32xf32>,
    %c0_66 = arith.constant 0 : index
    %c0_67 = arith.constant 0 : index
    %388 = vector.load %arg13[%c0_66, %c0_67] : memref<8x32xf32, #tpu.memory_space<vmem>>, vector<8x32xf32>
    tpu.vector_store %arg13[%c0_66, %c0_67], %385 {strides = array<i32>} : memref<8x32xf32, #tpu.memory_space<vmem>>, vector<8x32xf32>,
    %c0_68 = arith.constant 0 : index
    %c0_69 = arith.constant 0 : index
    %389 = vector.load %arg14[%c0_68, %c0_69] : memref<8x32xf32, #tpu.memory_space<vmem>>, vector<8x32xf32>
    tpu.vector_store %arg14[%c0_68, %c0_69], %383 {strides = array<i32>} : memref<8x32xf32, #tpu.memory_space<vmem>>, vector<8x32xf32>,
    %c0_i32_70 = arith.constant 0 : i32
    %390 = arith.cmpi eq, %arg1, %c0_i32_70 : i32
    %391 = arith.extui %390 : i1 to i32
    %c0_i32_71 = arith.constant 0 : i32
    %392 = arith.cmpi ne, %391, %c0_i32_71 : i32
    scf.if %392 {
      %c0_72 = arith.constant 0 : index
      %c0_73 = arith.constant 0 : index
      %393 = vector.load %arg6[%c0_72, %c0_73] : memref<32x16xf32, #tpu.memory_space<vmem>>, vector<32x16xf32>
      %cst_74 = arith.constant dense<0.000000e+00> : vector<8x16xf32>
      %394 = tpu.matmul %385, %393, %cst_74 {dimension_numbers = #tpu.dot_dimension_numbers<[1], [0], [0], [1], [0, 0, 1, 1], [], []>} : vector<8x32xf32>, vector<32x16xf32>, vector<8x16xf32> -> vector<8x16xf32>
      %c0_75 = arith.constant 0 : index
      %c0_76 = arith.constant 0 : index
      %395 = vector.load %arg7[%c0_75, %c0_76] : memref<1x16xf32, #tpu.memory_space<vmem>>, vector<1x16xf32>
      %396 = vector.broadcast %395 : vector<1x16xf32> to vector<8x16xf32>
      %397 = arith.addf %394, %396 : vector<8x16xf32>
      %cst_77 = arith.constant 0.000000e+00 : f32
      %398 = vector.broadcast %cst_77 : f32 to vector<8x16xf32>
      %399 = arith.cmpf ogt, %397, %398 : vector<8x16xf32>
      %cst_78 = arith.constant 0.00999999977 : f32
      %400 = vector.broadcast %cst_78 : f32 to vector<8x16xf32>
      %401 = arith.mulf %400, %397 : vector<8x16xf32>
      %402 = arith.select %399, %397, %401 : vector<8x16xi1>, vector<8x16xf32>
      %c0_79 = arith.constant 0 : index
      %c0_80 = arith.constant 0 : index
      %403 = vector.load %arg8[%c0_79, %c0_80] : memref<16x1xf32, #tpu.memory_space<vmem>>, vector<16x1xf32>
      %cst_81 = arith.constant dense<0.000000e+00> : vector<8x1xf32>
      %404 = tpu.matmul %402, %403, %cst_81 {dimension_numbers = #tpu.dot_dimension_numbers<[1], [0], [0], [1], [0, 0, 1, 1], [], []>} : vector<8x16xf32>, vector<16x1xf32>, vector<8x1xf32> -> vector<8x1xf32>
      %c0_82 = arith.constant 0 : index
      %c0_83 = arith.constant 0 : index
      %405 = vector.load %arg9[%c0_82, %c0_83] : memref<1x1xf32, #tpu.memory_space<vmem>>, vector<1x1xf32>
      %406 = vector.broadcast %405 : vector<1x1xf32> to vector<8x1xf32>
      %407 = arith.addf %404, %406 : vector<8x1xf32>
      %c0_84 = arith.constant 0 : index
      %c0_85 = arith.constant 0 : index
      %408 = vector.load %arg10[%c0_84, %c0_85] : memref<8x1xf32, #tpu.memory_space<vmem>>, vector<8x1xf32>
      tpu.vector_store %arg10[%c0_84, %c0_85], %407 {strides = array<i32>} : memref<8x1xf32, #tpu.memory_space<vmem>>, vector<8x1xf32>,
    } else {
    }
    return
  }
  func.func @transform_0(%arg0: i32, %arg1: i32) -> (i32, i32, i32) {
    %c0_i32 = arith.constant 0 : i32
    %c0_i32_0 = arith.constant 0 : i32
    return %arg1, %arg0, %c0_i32 : i32, i32, i32
  }
  func.func @transform_1(%arg0: i32, %arg1: i32) -> (i32, i32) {
    %c0_i32 = arith.constant 0 : i32
    %c0_i32_0 = arith.constant 0 : i32
    %c0_i32_1 = arith.constant 0 : i32
    return %c0_i32, %c0_i32_0 : i32, i32
  }
  func.func @transform_2(%arg0: i32, %arg1: i32) -> (i32, i32) {
    %c0_i32 = arith.constant 0 : i32
    %c0_i32_0 = arith.constant 0 : i32
    %c0_i32_1 = arith.constant 0 : i32
    return %c0_i32, %c0_i32_0 : i32, i32
  }
  func.func @transform_3(%arg0: i32, %arg1: i32) -> (i32, i32) {
    %c0_i32 = arith.constant 0 : i32
    %c0_i32_0 = arith.constant 0 : i32
    %c0_i32_1 = arith.constant 0 : i32
    return %c0_i32, %c0_i32_0 : i32, i32
  }
  func.func @transform_4(%arg0: i32, %arg1: i32) -> (i32, i32) {
    %c0_i32 = arith.constant 0 : i32
    %c0_i32_0 = arith.constant 0 : i32
    %c0_i32_1 = arith.constant 0 : i32
    return %c0_i32, %c0_i32_0 : i32, i32
  }
  func.func @transform_5(%arg0: i32, %arg1: i32) -> (i32, i32) {
    %c0_i32 = arith.constant 0 : i32
    %c0_i32_0 = arith.constant 0 : i32
    %c0_i32_1 = arith.constant 0 : i32
    return %c0_i32, %c0_i32_0 : i32, i32
  }
  func.func @transform_6(%arg0: i32, %arg1: i32) -> (i32, i32) {
    %c0_i32 = arith.constant 0 : i32
    %c0_i32_0 = arith.constant 0 : i32
    %c0_i32_1 = arith.constant 0 : i32
    return %c0_i32, %c0_i32_0 : i32, i32
  }
  func.func @transform_7(%arg0: i32, %arg1: i32) -> (i32, i32) {
    %c0_i32 = arith.constant 0 : i32
    %c0_i32_0 = arith.constant 0 : i32
    %c0_i32_1 = arith.constant 0 : i32
    return %c0_i32, %c0_i32_0 : i32, i32
  }
  func.func @transform_8(%arg0: i32, %arg1: i32) -> (i32, i32) {
    %c0_i32 = arith.constant 0 : i32
    %c0_i32_0 = arith.constant 0 : i32
    return %arg0, %c0_i32 : i32, i32
  }
}

</mosaic_0001>

<llo_original>
// kernel: sohlstm_forward.1
$region0: #{sohlstm_forward.1}
  #allocation0 [shape = 'u32[]', space=smem, size = 0x4, offset = 0x4, fixed_abs, tag = 'smem constant byte address 0x4 - core index']
  #allocation1 [shape = 'u32[144,128]{1,0:T(1,128)}', space=vmem, size = 0x12000, scoped, tag = 'internal scratch']
  #allocation2 [shape = 'f32[8,32]{1,0:T(8,128)}', space=vmem, size = 0x1000, scoped, tag = 'scratch operand']
  #allocation3 [shape = 'f32[8,32]{1,0:T(8,128)}', space=vmem, size = 0x1000, scoped, tag = 'scratch operand']
  #allocation4 [shape = 'f32[8,32]{1,0:T(8,128)}', space=vmem, size = 0x1000, scoped, tag = 'scratch operand']
  #allocation5 [shape = 'f32[8,32]{1,0:T(8,128)}', space=vmem, size = 0x1000, scoped, tag = 'scratch operand']
  #allocation6 [shape = 'f32[1,1]{1,0:T(1,128)S(1)}', space=vmem, size = 0x200, scoped, tag = 'scoped memory for sohlstm_forward.1']
  %s0 = inlined_call_operand.vmem [shape: bf16[8,8,128], index: 0, kind: input, shape index: {}]
  %s1 = inlined_call_operand.vmem [shape: bf16[64,256], index: 1, kind: input, shape index: {}]
  %s2 = inlined_call_operand.vmem [shape: bf16[32,128], index: 2, kind: input, shape index: {}]
  %s3 = inlined_call_operand.vmem [shape: f32[1,128], index: 3, kind: input, shape index: {}]
  %s4 = inlined_call_operand.vmem [shape: f32[32,16], index: 4, kind: input, shape index: {}]
  %s5 = inlined_call_operand.vmem [shape: f32[1,16], index: 5, kind: input, shape index: {}]
  %s6 = inlined_call_operand.vmem [shape: f32[16,1], index: 6, kind: input, shape index: {}]
  %s7 = inlined_call_operand.<no memory space> [shape: f32[1,1], index: 7, kind: input, shape index: {}]
  %s8 = inlined_call_operand.vmem [shape: f32[8,1], index: 8, kind: output, shape index: {}]
  %s9 = sld [smem:[#allocation0]]
  $region50: #{sohlstm_forward.1} parent=0
    _
  %s11 = ssub.s32 1, %s9
  %s12 = scalar_select 0, %s11, %s9
  %v13 = vstv %s7
  %14 = vst [vmem:[#allocation6] sm:$0x1] %v13
  // Predicated region
  $region2: #{sohlstm_forward.1} parent=0 // pred_check
    _
  $region3: #{sohlstm_forward.1} parent=0 // pred_check_branch
    %16 = sbr.rel (0) target = $region5
  $region4: #{sohlstm_forward.1} parent=0 // pred_region
    _
  $region5: #{sohlstm_forward.1} parent=0 // pred_fallthru
    _
  // Predicated region
  $region6: #{sohlstm_forward.1} parent=0 // pred_check
    _
  $region7: #{sohlstm_forward.1} parent=0 // pred_check_branch
    %18 = sbr.rel (0) target = $region9
  $region8: #{sohlstm_forward.1} parent=0 // pred_region
    _
  $region9: #{sohlstm_forward.1} parent=0 // pred_fallthru
    _
  // Predicated region
  $region10: #{sohlstm_forward.1} parent=0 // pred_check
    _
  $region11: #{sohlstm_forward.1} parent=0 // pred_check_branch
    %20 = sbr.rel (0) target = $region13
  $region12: #{sohlstm_forward.1} parent=0 // pred_region
    _
  $region13: #{sohlstm_forward.1} parent=0 // pred_fallthru
    _
  // Predicated region
  $region14: #{sohlstm_forward.1} parent=0 // pred_check
    _
  $region15: #{sohlstm_forward.1} parent=0 // pred_check_branch
    %22 = sbr.rel (0) target = $region17
  $region16: #{sohlstm_forward.1} parent=0 // pred_region
    _
  $region17: #{sohlstm_forward.1} parent=0 // pred_fallthru
    _
  // Predicated region
  $region18: #{sohlstm_forward.1} parent=0 // pred_check
    _
  $region19: #{sohlstm_forward.1} parent=0 // pred_check_branch
    %24 = sbr.rel (0) target = $region21
  $region20: #{sohlstm_forward.1} parent=0 // pred_region
    _
  $region21: #{sohlstm_forward.1} parent=0 // pred_fallthru
    _
  // Predicated region
  $region22: #{sohlstm_forward.1} parent=0 // pred_check
    _
  $region23: #{sohlstm_forward.1} parent=0 // pred_check_branch
    %26 = sbr.rel (0) target = $region25
  $region24: #{sohlstm_forward.1} parent=0 // pred_region
    _
  $region25: #{sohlstm_forward.1} parent=0 // pred_fallthru
    _
  // Predicated region
  $region26: #{sohlstm_forward.1} parent=0 // pred_check
    _
  $region27: #{sohlstm_forward.1} parent=0 // pred_check_branch
    %28 = sbr.rel (0) target = $region29
  $region28: #{sohlstm_forward.1} parent=0 // pred_region
    _
  $region29: #{sohlstm_forward.1} parent=0 // pred_fallthru
    _
  // Predicated region
  $region30: #{sohlstm_forward.1} parent=0 // pred_check
    _
  $region31: #{sohlstm_forward.1} parent=0 // pred_check_branch
    %30 = sbr.rel (0) target = $region33
  $region32: #{sohlstm_forward.1} parent=0 // pred_region
    _
  $region33: #{sohlstm_forward.1} parent=0 // pred_fallthru
    _
  %p32 = scmp.eq.s32.totalorder 0, 0
  // Predicated region
  $region34: #{sohlstm_forward.1} parent=0 // pred_check
    %p33 = pneg %p32
  $region35: #{sohlstm_forward.1} parent=0 // pred_check_branch
    %35 = sbr.rel (%p33) target = $region37
  $region36: #{sohlstm_forward.1} parent=0 // pred_region
    %vm36 = vcmask 261120
    %37 = vst.msk [vmem:[#allocation2] sm:$0xff] %vm36, 0.0
    %38 = vst.msk [vmem:[#allocation3] sm:$0xff] %vm36, 0.0
    %39 = vst.msk [vmem:[#allocation4] sm:$0xff] %vm36, 0.0
    %40 = vst.msk [vmem:[#allocation5] sm:$0xff] %vm36, 0.0
  $region37: #{sohlstm_forward.1} parent=0 // pred_fallthru
    _
  %v41 = vld [vmem:[%s2] sm:$0xf]
  %v42 = vld [vmem:[%s2 + $0x4] sm:$0xf]
  %v43 = vld [vmem:[%s2 + $0x8] sm:$0xf]
  %v44 = vld [vmem:[%s2 + $0xc] sm:$0xf]
  %v45 = vld [vmem:[%s1] sm:$0xff]
  %v46 = vld [vmem:[%s1 + $0x8] sm:$0xff]
  %v47 = vld [vmem:[%s1 + $0x10] sm:$0xff]
  %v48 = vld [vmem:[%s1 + $0x18] sm:$0xff]
  %v49 = vld [vmem:[%s1 + $0x20] sm:$0xff]
  %v50 = vld [vmem:[%s1 + $0x28] sm:$0xff]
  %v51 = vld [vmem:[%s1 + $0x30] sm:$0xff]
  %v52 = vld [vmem:[%s1 + $0x38] sm:$0xff]
  %v53 = vld [vmem:[%s3] sm:$0x1]
  %v55 = vlaneseq
  %v56 = vshrl.u32 %v55, 7
  %v57 = vsub.s32 0, %v56
  %v58 = vrot.slane %v53, %v57
  %v60 = vlaneseq
  %v61 = vand.u32 %v60, 127
  %vm62 = vcmp.ge.s32.totalorder %v61, 64
  %vm63 = vcmp.lt.s32.totalorder %v61, 96
  %vm64 = vmand %vm62, %vm63
  %v65 = vld [vmem:[#allocation2] sm:$0xff]
  %v66 = vld [vmem:[#allocation3] sm:$0xff]
  %v67 = vld [vmem:[#allocation4] sm:$0xff]
  %v68 = vld [vmem:[#allocation5] sm:$0xff]
  %70 = vrot.lane.b32.xlu0 %v67, 32
  %v71 = vpop.permute.xlu0 %70
  %vm73 = vcmask 261120
  %v74 = vsel %vm73, %v65, %v71
  %v75 = vpack.c.bf16 %v74, %v74
  %v84 = vunpack.c.l.b16 %v45
  %v85 = vunpack.c.h.b16 %v45
  %v86 = vunpack.c.l.b16 %v46
  %v87 = vunpack.c.h.b16 %v46
  %v88 = vunpack.c.l.b16 %v47
  %v89 = vunpack.c.h.b16 %v47
  %v90 = vunpack.c.l.b16 %v48
  %v91 = vunpack.c.h.b16 %v48
  %v92 = vunpack.c.l.b16 %v49
  %v93 = vunpack.c.h.b16 %v49
  %v94 = vunpack.c.l.b16 %v50
  %v95 = vunpack.c.h.b16 %v50
  %v96 = vunpack.c.l.b16 %v51
  %v97 = vunpack.c.h.b16 %v51
  %v98 = vunpack.c.l.b16 %v52
  %v99 = vunpack.c.h.b16 %v52
  %v100 = vpack.c.b16 %v86, %v84
  %v101 = vpack.c.b16 %v87, %v85
  %v102 = vpack.c.b16 %v90, %v88
  %v103 = vpack.c.b16 %v91, %v89
  %v104 = vpack.c.b16 %v94, %v92
  %v105 = vpack.c.b16 %v95, %v93
  %v106 = vpack.c.b16 %v98, %v96
  %v107 = vpack.c.b16 %v99, %v97
  %vm116 = vcmask 523264
  %v118 = vsel %vm116, %v75, 0
  %120 = vmatprep.subr.bf16.mxu0 %v101
  %121 = vmatpush1.bf16.msra.mxu0 %v100
  %122 = vmatprep.subr.bf16.mxu0 %v103
  %123 = vmatpush1.bf16.msra.mxu0 %v102
  %124 = vmatprep.subr.bf16.mxu0 %v105
  %125 = vmatpush1.bf16.msra.mxu0 %v104
  %126 = vmatprep.subr.bf16.mxu0 %v107
  %127 = vmatpush1.bf16.msra.mxu0 %v106
  %128 = vmatprep.subr.bf16.mxu0 0
  %129 = vmatpush1.bf16.msra.mxu0 0
  %130 = vmatprep.subr.bf16.mxu0 0
  %131 = vmatpush1.bf16.msra.mxu0 0
  %132 = vmatprep.subr.bf16.mxu0 0
  %133 = vmatpush1.bf16.msra.mxu0 0
  %134 = vmatprep.subr.bf16.mxu0 0
  %135 = vmatpush1.bf16.msra.mxu0 0
  %136 = vmatprep.subr.bf16.mxu0 0
  %137 = vmatpush1.bf16.msra.mxu0 0
  %138 = vmatprep.subr.bf16.mxu0 0
  %139 = vmatpush1.bf16.msra.mxu0 0
  %140 = vmatprep.subr.bf16.mxu0 0
  %141 = vmatpush1.bf16.msra.mxu0 0
  %142 = vmatprep.subr.bf16.mxu0 0
  %143 = vmatpush1.bf16.msra.mxu0 0
  %144 = vmatprep.subr.bf16.mxu0 0
  %145 = vmatpush1.bf16.msra.mxu0 0
  %146 = vmatprep.subr.bf16.mxu0 0
  %147 = vmatpush1.bf16.msra.mxu0 0
  %148 = vmatprep.subr.bf16.mxu0 0
  %149 = vmatpush1.bf16.msra.mxu0 0
  %150 = vmatprep.subr.bf16.mxu0 0
  %151 = vmatpush1.bf16.msra.mxu0 0
  %152 = vmatprep.mubr.bf16.mxu0 0
  %153 = vmatmul.mubr.bf16.gmra.mrb[0].mxu0 %v118
  %v154 = vpop.f32.mrb[0].mxu0
  %v155 = vadd.f32 0.0, %v154
  %v156 = vpop.f32.mrb[0].mxu0
  %v157 = vadd.f32 0.0, %v156
  %v158 = vpop.f32.mrb[0].mxu0
  %v159 = vpop.f32.mrb[0].mxu0
  %160 = vdwg.mxu0
  %v161 = vld [vmem:[%s0] sm:$0xf]
  %v162 = vunpack.c.l.bf16 %v161
  %v163 = vadd.f32 %v162, %v155
  %v164 = vxor.u32 %v163, 2147483648
  %v165 = vmul.f32 %v164, 1.442695
  %v166 = vpow.pop %v165
  %v167 = vadd.f32 %v166, 1.0
  %v168 = vrcp.pop %v167
  %v169 = vmul.f32 1.0, %v168
  %v170 = vtanh.pop %v163
  %v171 = vsel %vm64, %v170, %v169
  %173 = vrot.lane.b32.xlu0 %v66, 32
  %v174 = vpop.permute.xlu0 %173
  %v176 = vmul.f32 %v171, %v174
  %178 = vrot.lane.b32.xlu0 %v171, 64
  %v179 = vpop.permute.xlu0 %178
  %v181 = vmul.f32 %v171, %v179
  %183 = vrot.lane.b32.xlu0 %v181, 32
  %v184 = vpop.permute.xlu0 %183
  %v186 = vadd.f32 %v176, %v184
  %v187 = vtanh.pop %v186
  %189 = vrot.lane.b32.xlu0 %v187, 64
  %v190 = vpop.permute.xlu0 %189
  %v192 = vmul.f32 %v171, %v190
  %v193 = vpack.c.bf16 %v192, %v192
  %195 = vrot.lane.b32.xlu0 %v193, 32
  %v196 = vpop.permute.xlu0 %195
  %v201 = vunpack.c.l.b16 %v41
  %v202 = vunpack.c.l.b16 %v42
  %v203 = vunpack.c.l.b16 %v43
  %v204 = vunpack.c.l.b16 %v44
  %v205 = vpack.c.b16 %v202, %v201
  %v206 = vpack.c.b16 %v204, %v203
  %v210 = vsel %vm73, %v196, 0
  %212 = vmatprep.subr.bf16.mxu0 0
  %213 = vmatpush1.bf16.msra.mxu0 %v205
  %214 = vmatprep.subr.bf16.mxu0 0
  %215 = vmatpush1.bf16.msra.mxu0 %v206
  %216 = vmatprep.subr.bf16.mxu0 0
  %217 = vmatpush1.bf16.msra.mxu0 0
  %218 = vmatprep.subr.bf16.mxu0 0
  %219 = vmatpush1.bf16.msra.mxu0 0
  %220 = vmatprep.subr.bf16.mxu0 0
  %221 = vmatpush1.bf16.msra.mxu0 0
  %222 = vmatprep.subr.bf16.mxu0 0
  %223 = vmatpush1.bf16.msra.mxu0 0
  %224 = vmatprep.subr.bf16.mxu0 0
  %225 = vmatpush1.bf16.msra.mxu0 0
  %226 = vmatprep.subr.bf16.mxu0 0
  %227 = vmatpush1.bf16.msra.mxu0 0
  %228 = vmatprep.subr.bf16.mxu0 0
  %229 = vmatpush1.bf16.msra.mxu0 0
  %230 = vmatprep.subr.bf16.mxu0 0
  %231 = vmatpush1.bf16.msra.mxu0 0
  %232 = vmatprep.subr.bf16.mxu0 0
  %233 = vmatpush1.bf16.msra.mxu0 0
  %234 = vmatprep.subr.bf16.mxu0 0
  %235 = vmatpush1.bf16.msra.mxu0 0
  %236 = vmatprep.subr.bf16.mxu0 0
  %237 = vmatpush1.bf16.msra.mxu0 0
  %238 = vmatprep.subr.bf16.mxu0 0
  %239 = vmatpush1.bf16.msra.mxu0 0
  %240 = vmatprep.subr.bf16.mxu0 0
  %241 = vmatpush1.bf16.msra.mxu0 0
  %242 = vmatprep.subr.bf16.mxu0 0
  %243 = vmatpush1.bf16.msra.mxu0 0
  %244 = vmatprep.mubr.bf16.mxu0 0
  %245 = vmatmul.mubr.bf16.gmra.mrb[0].mxu0 %v210
  %v246 = vpop.f32.mrb[0].mxu0
  %v247 = vadd.f32 %v157, %v246
  %v248 = vpop.f32.mrb[0].mxu0
  %v249 = vpop.f32.mrb[0].mxu0
  %v250 = vpop.f32.mrb[0].mxu0
  %251 = vdwg.mxu0
  %v252 = vadd.f32 %v247, %v58
  %v253 = vxor.u32 %v252, 2147483648
  %v254 = vmul.f32 %v253, 1.442695
  %v255 = vpow.pop %v254
  %v256 = vadd.f32 %v255, 1.0
  %v257 = vrcp.pop %v256
  %v258 = vmul.f32 1.0, %v257
  %v259 = vtanh.pop %v252
  %v260 = vsel %vm64, %v259, %v258
  %262 = vrot.lane.b32.xlu0 %v68, 32
  %v263 = vpop.permute.xlu0 %262
  %v265 = vmul.f32 %v260, %v263
  %267 = vrot.lane.b32.xlu0 %v260, 64
  %v268 = vpop.permute.xlu0 %267
  %v270 = vmul.f32 %v260, %v268
  %272 = vrot.lane.b32.xlu0 %v270, 32
  %v273 = vpop.permute.xlu0 %272
  %v275 = vadd.f32 %v265, %v273
  %v276 = vtanh.pop %v275
  %278 = vrot.lane.b32.xlu0 %v276, 64
  %v279 = vpop.permute.xlu0 %278
  %v281 = vmul.f32 %v260, %v279
  %283 = vrot.lane.b32.xlu0 %v192, 32
  %v284 = vpop.permute.xlu0 %283
  %287 = vrot.lane.b32.xlu0 %v281, 64
  %v288 = vpop.permute.xlu0 %287
  %v290 = vsel %vm73, %v284, %v288
  %v291 = vpack.c.bf16 %v290, %v290
  %v293 = vsel %vm116, %v291, 0
  %295 = vmatprep.subr.bf16.mxu0 %v101
  %296 = vmatpush1.bf16.msra.mxu0 %v100
  %297 = vmatprep.subr.bf16.mxu0 %v103
  %298 = vmatpush1.bf16.msra.mxu0 %v102
  %299 = vmatprep.subr.bf16.mxu0 %v105
  %300 = vmatpush1.bf16.msra.mxu0 %v104
  %301 = vmatprep.subr.bf16.mxu0 %v107
  %302 = vmatpush1.bf16.msra.mxu0 %v106
  %303 = vmatprep.subr.bf16.mxu0 0
  %304 = vmatpush1.bf16.msra.mxu0 0
  %305 = vmatprep.subr.bf16.mxu0 0
  %306 = vmatpush1.bf16.msra.mxu0 0
  %307 = vmatprep.subr.bf16.mxu0 0
  %308 = vmatpush1.bf16.msra.mxu0 0
  %309 = vmatprep.subr.bf16.mxu0 0
  %310 = vmatpush1.bf16.msra.mxu0 0
  %311 = vmatprep.subr.bf16.mxu0 0
  %312 = vmatpush1.bf16.msra.mxu0 0
  %313 = vmatprep.subr.bf16.mxu0 0
  %314 = vmatpush1.bf16.msra.mxu0 0
  %315 = vmatprep.subr.bf16.mxu0 0
  %316 = vmatpush1.bf16.msra.mxu0 0
  %317 = vmatprep.subr.bf16.mxu0 0
  %318 = vmatpush1.bf16.msra.mxu0 0
  %319 = vmatprep.subr.bf16.mxu0 0
  %320 = vmatpush1.bf16.msra.mxu0 0
  %321 = vmatprep.subr.bf16.mxu0 0
  %322 = vmatpush1.bf16.msra.mxu0 0
  %323 = vmatprep.subr.bf16.mxu0 0
  %324 = vmatpush1.bf16.msra.mxu0 0
  %325 = vmatprep.subr.bf16.mxu0 0
  %326 = vmatpush1.bf16.msra.mxu0 0
  %327 = vmatprep.mubr.bf16.mxu0 0
  %328 = vmatmul.mubr.bf16.gmra.mrb[0].mxu0 %v293
  %v329 = vpop.f32.mrb[0].mxu0
  %v330 = vadd.f32 0.0, %v329
  %v331 = vpop.f32.mrb[0].mxu0
  %v332 = vadd.f32 0.0, %v331
  %v333 = vpop.f32.mrb[0].mxu0
  %v334 = vpop.f32.mrb[0].mxu0
  %335 = vdwg.mxu0
  %s336 = scalar_lea.vmem %s0, 4
  %v337 = vld [vmem:[%s336] sm:$0xf]
  %v338 = vunpack.c.l.bf16 %v337
  %v339 = vadd.f32 %v338, %v330
  %v340 = vxor.u32 %v339, 2147483648
  %v341 = vmul.f32 %v340, 1.442695
  %v342 = vpow.pop %v341
  %v343 = vadd.f32 %v342, 1.0
  %v344 = vrcp.pop %v343
  %v345 = vmul.f32 1.0, %v344
  %v346 = vtanh.pop %v339
  %v347 = vsel %vm64, %v346, %v345
  %v348 = vmul.f32 %v347, %v186
  %350 = vrot.lane.b32.xlu0 %v347, 64
  %v351 = vpop.permute.xlu0 %350
  %v353 = vmul.f32 %v347, %v351
  %355 = vrot.lane.b32.xlu0 %v353, 32
  %v356 = vpop.permute.xlu0 %355
  %v358 = vadd.f32 %v348, %v356
  %v359 = vtanh.pop %v358
  %361 = vrot.lane.b32.xlu0 %v359, 64
  %v362 = vpop.permute.xlu0 %361
  %v364 = vmul.f32 %v347, %v362
  %v365 = vpack.c.bf16 %v364, %v364
  %367 = vrot.lane.b32.xlu0 %v365, 32
  %v368 = vpop.permute.xlu0 %367
  %v370 = vsel %vm73, %v368, 0
  %372 = vmatprep.subr.bf16.mxu0 0
  %373 = vmatpush1.bf16.msra.mxu0 %v205
  %374 = vmatprep.subr.bf16.mxu0 0
  %375 = vmatpush1.bf16.msra.mxu0 %v206
  %376 = vmatprep.subr.bf16.mxu0 0
  %377 = vmatpush1.bf16.msra.mxu0 0
  %378 = vmatprep.subr.bf16.mxu0 0
  %379 = vmatpush1.bf16.msra.mxu0 0
  %380 = vmatprep.subr.bf16.mxu0 0
  %381 = vmatpush1.bf16.msra.mxu0 0
  %382 = vmatprep.subr.bf16.mxu0 0
  %383 = vmatpush1.bf16.msra.mxu0 0
  %384 = vmatprep.subr.bf16.mxu0 0
  %385 = vmatpush1.bf16.msra.mxu0 0
  %386 = vmatprep.subr.bf16.mxu0 0
  %387 = vmatpush1.bf16.msra.mxu0 0
  %388 = vmatprep.subr.bf16.mxu0 0
  %389 = vmatpush1.bf16.msra.mxu0 0
  %390 = vmatprep.subr.bf16.mxu0 0
  %391 = vmatpush1.bf16.msra.mxu0 0
  %392 = vmatprep.subr.bf16.mxu0 0
  %393 = vmatpush1.bf16.msra.mxu0 0
  %394 = vmatprep.subr.bf16.mxu0 0
  %395 = vmatpush1.bf16.msra.mxu0 0
  %396 = vmatprep.subr.bf16.mxu0 0
  %397 = vmatpush1.bf16.msra.mxu0 0
  %398 = vmatprep.subr.bf16.mxu0 0
  %399 = vmatpush1.bf16.msra.mxu0 0
  %400 = vmatprep.subr.bf16.mxu0 0
  %401 = vmatpush1.bf16.msra.mxu0 0
  %402 = vmatprep.subr.bf16.mxu0 0
  %403 = vmatpush1.bf16.msra.mxu0 0
  %404 = vmatprep.mubr.bf16.mxu0 0
  %405 = vmatmul.mubr.bf16.gmra.mrb[0].mxu0 %v370
  %v406 = vpop.f32.mrb[0].mxu0
  %v407 = vadd.f32 %v332, %v406
  %v408 = vpop.f32.mrb[0].mxu0
  %v409 = vpop.f32.mrb[0].mxu0
  %v410 = vpop.f32.mrb[0].mxu0
  %411 = vdwg.mxu0
  %v412 = vadd.f32 %v407, %v58
  %v413 = vxor.u32 %v412, 2147483648
  %v414 = vmul.f32 %v413, 1.442695
  %v415 = vpow.pop %v414
  %v416 = vadd.f32 %v415, 1.0
  %v417 = vrcp.pop %v416
  %v418 = vmul.f32 1.0, %v417
  %v419 = vtanh.pop %v412
  %v420 = vsel %vm64, %v419, %v418
  %v421 = vmul.f32 %v420, %v275
  %423 = vrot.lane.b32.xlu0 %v420, 64
  %v424 = vpop.permute.xlu0 %423
  %v426 = vmul.f32 %v420, %v424
  %428 = vrot.lane.b32.xlu0 %v426, 32
  %v429 = vpop.permute.xlu0 %428
  %v431 = vadd.f32 %v421, %v429
  %v432 = vtanh.pop %v431
  %434 = vrot.lane.b32.xlu0 %v432, 64
  %v435 = vpop.permute.xlu0 %434
  %v437 = vmul.f32 %v420, %v435
  %439 = vrot.lane.b32.xlu0 %v364, 32
  %v440 = vpop.permute.xlu0 %439
  %443 = vrot.lane.b32.xlu0 %v437, 64
  %v444 = vpop.permute.xlu0 %443
  %v446 = vsel %vm73, %v440, %v444
  %v447 = vpack.c.bf16 %v446, %v446
  %v449 = vsel %vm116, %v447, 0
  %451 = vmatprep.subr.bf16.mxu0 %v101
  %452 = vmatpush1.bf16.msra.mxu0 %v100
  %453 = vmatprep.subr.bf16.mxu0 %v103
  %454 = vmatpush1.bf16.msra.mxu0 %v102
  %455 = vmatprep.subr.bf16.mxu0 %v105
  %456 = vmatpush1.bf16.msra.mxu0 %v104
  %457 = vmatprep.subr.bf16.mxu0 %v107
  %458 = vmatpush1.bf16.msra.mxu0 %v106
  %459 = vmatprep.subr.bf16.mxu0 0
  %460 = vmatpush1.bf16.msra.mxu0 0
  %461 = vmatprep.subr.bf16.mxu0 0
  %462 = vmatpush1.bf16.msra.mxu0 0
  %463 = vmatprep.subr.bf16.mxu0 0
  %464 = vmatpush1.bf16.msra.mxu0 0
  %465 = vmatprep.subr.bf16.mxu0 0
  %466 = vmatpush1.bf16.msra.mxu0 0
  %467 = vmatprep.subr.bf16.mxu0 0
  %468 = vmatpush1.bf16.msra.mxu0 0
  %469 = vmatprep.subr.bf16.mxu0 0
  %470 = vmatpush1.bf16.msra.mxu0 0
  %471 = vmatprep.subr.bf16.mxu0 0
  %472 = vmatpush1.bf16.msra.mxu0 0
  %473 = vmatprep.subr.bf16.mxu0 0
  %474 = vmatpush1.bf16.msra.mxu0 0
  %475 = vmatprep.subr.bf16.mxu0 0
  %476 = vmatpush1.bf16.msra.mxu0 0
  %477 = vmatprep.subr.bf16.mxu0 0
  %478 = vmatpush1.bf16.msra.mxu0 0
  %479 = vmatprep.subr.bf16.mxu0 0
  %480 = vmatpush1.bf16.msra.mxu0 0
  %481 = vmatprep.subr.bf16.mxu0 0
  %482 = vmatpush1.bf16.msra.mxu0 0
  %483 = vmatprep.mubr.bf16.mxu0 0
  %484 = vmatmul.mubr.bf16.gmra.mrb[0].mxu0 %v449
  %v485 = vpop.f32.mrb[0].mxu0
  %v486 = vadd.f32 0.0, %v485
  %v487 = vpop.f32.mrb[0].mxu0
  %v488 = vadd.f32 0.0, %v487
  %v489 = vpop.f32.mrb[0].mxu0
  %v490 = vpop.f32.mrb[0].mxu0
  %491 = vdwg.mxu0
  %s492 = scalar_lea.vmem %s0, 8
  %v493 = vld [vmem:[%s492] sm:$0xf]
  %v494 = vunpack.c.l.bf16 %v493
  %v495 = vadd.f32 %v494, %v486
  %v496 = vxor.u32 %v495, 2147483648
  %v497 = vmul.f32 %v496, 1.442695
  %v498 = vpow.pop %v497
  %v499 = vadd.f32 %v498, 1.0
  %v500 = vrcp.pop %v499
  %v501 = vmul.f32 1.0, %v500
  %v502 = vtanh.pop %v495
  %v503 = vsel %vm64, %v502, %v501
  %v504 = vmul.f32 %v503, %v358
  %506 = vrot.lane.b32.xlu0 %v503, 64
  %v507 = vpop.permute.xlu0 %506
  %v509 = vmul.f32 %v503, %v507
  %511 = vrot.lane.b32.xlu0 %v509, 32
  %v512 = vpop.permute.xlu0 %511
  %v514 = vadd.f32 %v504, %v512
  %v515 = vtanh.pop %v514
  %517 = vrot.lane.b32.xlu0 %v515, 64
  %v518 = vpop.permute.xlu0 %517
  %v520 = vmul.f32 %v503, %v518
  %v521 = vpack.c.bf16 %v520, %v520
  %523 = vrot.lane.b32.xlu0 %v521, 32
  %v524 = vpop.permute.xlu0 %523
  %v526 = vsel %vm73, %v524, 0
  %528 = vmatprep.subr.bf16.mxu0 0
  %529 = vmatpush1.bf16.msra.mxu0 %v205
  %530 = vmatprep.subr.bf16.mxu0 0
  %531 = vmatpush1.bf16.msra.mxu0 %v206
  %532 = vmatprep.subr.bf16.mxu0 0
  %533 = vmatpush1.bf16.msra.mxu0 0
  %534 = vmatprep.subr.bf16.mxu0 0
  %535 = vmatpush1.bf16.msra.mxu0 0
  %536 = vmatprep.subr.bf16.mxu0 0
  %537 = vmatpush1.bf16.msra.mxu0 0
  %538 = vmatprep.subr.bf16.mxu0 0
  %539 = vmatpush1.bf16.msra.mxu0 0
  %540 = vmatprep.subr.bf16.mxu0 0
  %541 = vmatpush1.bf16.msra.mxu0 0
  %542 = vmatprep.subr.bf16.mxu0 0
  %543 = vmatpush1.bf16.msra.mxu0 0
  %544 = vmatprep.subr.bf16.mxu0 0
  %545 = vmatpush1.bf16.msra.mxu0 0
  %546 = vmatprep.subr.bf16.mxu0 0
  %547 = vmatpush1.bf16.msra.mxu0 0
  %548 = vmatprep.subr.bf16.mxu0 0
  %549 = vmatpush1.bf16.msra.mxu0 0
  %550 = vmatprep.subr.bf16.mxu0 0
  %551 = vmatpush1.bf16.msra.mxu0 0
  %552 = vmatprep.subr.bf16.mxu0 0
  %553 = vmatpush1.bf16.msra.mxu0 0
  %554 = vmatprep.subr.bf16.mxu0 0
  %555 = vmatpush1.bf16.msra.mxu0 0
  %556 = vmatprep.subr.bf16.mxu0 0
  %557 = vmatpush1.bf16.msra.mxu0 0
  %558 = vmatprep.subr.bf16.mxu0 0
  %559 = vmatpush1.bf16.msra.mxu0 0
  %560 = vmatprep.mubr.bf16.mxu0 0
  %561 = vmatmul.mubr.bf16.gmra.mrb[0].mxu0 %v526
  %v562 = vpop.f32.mrb[0].mxu0
  %v563 = vadd.f32 %v488, %v562
  %v564 = vpop.f32.mrb[0].mxu0
  %v565 = vpop.f32.mrb[0].mxu0
  %v566 = vpop.f32.mrb[0].mxu0
  %567 = vdwg.mxu0
  %v568 = vadd.f32 %v563, %v58
  %v569 = vxor.u32 %v568, 2147483648
  %v570 = vmul.f32 %v569, 1.442695
  %v571 = vpow.pop %v570
  %v572 = vadd.f32 %v571, 1.0
  %v573 = vrcp.pop %v572
  %v574 = vmul.f32 1.0, %v573
  %v575 = vtanh.pop %v568
  %v576 = vsel %vm64, %v575, %v574
  %v577 = vmul.f32 %v576, %v431
  %579 = vrot.lane.b32.xlu0 %v576, 64
  %v580 = vpop.permute.xlu0 %579
  %v582 = vmul.f32 %v576, %v580
  %584 = vrot.lane.b32.xlu0 %v582, 32
  %v585 = vpop.permute.xlu0 %584
  %v587 = vadd.f32 %v577, %v585
  %v588 = vtanh.pop %v587
  %590 = vrot.lane.b32.xlu0 %v588, 64
  %v591 = vpop.permute.xlu0 %590
  %v593 = vmul.f32 %v576, %v591
  %595 = vrot.lane.b32.xlu0 %v520, 32
  %v596 = vpop.permute.xlu0 %595
  %599 = vrot.lane.b32.xlu0 %v593, 64
  %v600 = vpop.permute.xlu0 %599
  %v602 = vsel %vm73, %v596, %v600
  %v603 = vpack.c.bf16 %v602, %v602
  %v605 = vsel %vm116, %v603, 0
  %607 = vmatprep.subr.bf16.mxu0 %v101
  %608 = vmatpush1.bf16.msra.mxu0 %v100
  %609 = vmatprep.subr.bf16.mxu0 %v103
  %610 = vmatpush1.bf16.msra.mxu0 %v102
  %611 = vmatprep.subr.bf16.mxu0 %v105
  %612 = vmatpush1.bf16.msra.mxu0 %v104
  %613 = vmatprep.subr.bf16.mxu0 %v107
  %614 = vmatpush1.bf16.msra.mxu0 %v106
  %615 = vmatprep.subr.bf16.mxu0 0
  %616 = vmatpush1.bf16.msra.mxu0 0
  %617 = vmatprep.subr.bf16.mxu0 0
  %618 = vmatpush1.bf16.msra.mxu0 0
  %619 = vmatprep.subr.bf16.mxu0 0
  %620 = vmatpush1.bf16.msra.mxu0 0
  %621 = vmatprep.subr.bf16.mxu0 0
  %622 = vmatpush1.bf16.msra.mxu0 0
  %623 = vmatprep.subr.bf16.mxu0 0
  %624 = vmatpush1.bf16.msra.mxu0 0
  %625 = vmatprep.subr.bf16.mxu0 0
  %626 = vmatpush1.bf16.msra.mxu0 0
  %627 = vmatprep.subr.bf16.mxu0 0
  %628 = vmatpush1.bf16.msra.mxu0 0
  %629 = vmatprep.subr.bf16.mxu0 0
  %630 = vmatpush1.bf16.msra.mxu0 0
  %631 = vmatprep.subr.bf16.mxu0 0
  %632 = vmatpush1.bf16.msra.mxu0 0
  %633 = vmatprep.subr.bf16.mxu0 0
  %634 = vmatpush1.bf16.msra.mxu0 0
  %635 = vmatprep.subr.bf16.mxu0 0
  %636 = vmatpush1.bf16.msra.mxu0 0
  %637 = vmatprep.subr.bf16.mxu0 0
  %638 = vmatpush1.bf16.msra.mxu0 0
  %639 = vmatprep.mubr.bf16.mxu0 0
  %640 = vmatmul.mubr.bf16.gmra.mrb[0].mxu0 %v605
  %v641 = vpop.f32.mrb[0].mxu0
  %v642 = vadd.f32 0.0, %v641
  %v643 = vpop.f32.mrb[0].mxu0
  %v644 = vadd.f32 0.0, %v643
  %v645 = vpop.f32.mrb[0].mxu0
  %v646 = vpop.f32.mrb[0].mxu0
  %647 = vdwg.mxu0
  %s648 = scalar_lea.vmem %s0, 12
  %v649 = vld [vmem:[%s648] sm:$0xf]
  %v650 = vunpack.c.l.bf16 %v649
  %v651 = vadd.f32 %v650, %v642
  %v652 = vxor.u32 %v651, 2147483648
  %v653 = vmul.f32 %v652, 1.442695
  %v654 = vpow.pop %v653
  %v655 = vadd.f32 %v654, 1.0
  %v656 = vrcp.pop %v655
  %v657 = vmul.f32 1.0, %v656
  %v658 = vtanh.pop %v651
  %v659 = vsel %vm64, %v658, %v657
  %v660 = vmul.f32 %v659, %v514
  %662 = vrot.lane.b32.xlu0 %v659, 64
  %v663 = vpop.permute.xlu0 %662
  %v665 = vmul.f32 %v659, %v663
  %667 = vrot.lane.b32.xlu0 %v665, 32
  %v668 = vpop.permute.xlu0 %667
  %v670 = vadd.f32 %v660, %v668
  %v671 = vtanh.pop %v670
  %673 = vrot.lane.b32.xlu0 %v671, 64
  %v674 = vpop.permute.xlu0 %673
  %v676 = vmul.f32 %v659, %v674
  %v677 = vpack.c.bf16 %v676, %v676
  %679 = vrot.lane.b32.xlu0 %v677, 32
  %v680 = vpop.permute.xlu0 %679
  %v682 = vsel %vm73, %v680, 0
  %684 = vmatprep.subr.bf16.mxu0 0
  %685 = vmatpush1.bf16.msra.mxu0 %v205
  %686 = vmatprep.subr.bf16.mxu0 0
  %687 = vmatpush1.bf16.msra.mxu0 %v206
  %688 = vmatprep.subr.bf16.mxu0 0
  %689 = vmatpush1.bf16.msra.mxu0 0
  %690 = vmatprep.subr.bf16.mxu0 0
  %691 = vmatpush1.bf16.msra.mxu0 0
  %692 = vmatprep.subr.bf16.mxu0 0
  %693 = vmatpush1.bf16.msra.mxu0 0
  %694 = vmatprep.subr.bf16.mxu0 0
  %695 = vmatpush1.bf16.msra.mxu0 0
  %696 = vmatprep.subr.bf16.mxu0 0
  %697 = vmatpush1.bf16.msra.mxu0 0
  %698 = vmatprep.subr.bf16.mxu0 0
  %699 = vmatpush1.bf16.msra.mxu0 0
  %700 = vmatprep.subr.bf16.mxu0 0
  %701 = vmatpush1.bf16.msra.mxu0 0
  %702 = vmatprep.subr.bf16.mxu0 0
  %703 = vmatpush1.bf16.msra.mxu0 0
  %704 = vmatprep.subr.bf16.mxu0 0
  %705 = vmatpush1.bf16.msra.mxu0 0
  %706 = vmatprep.subr.bf16.mxu0 0
  %707 = vmatpush1.bf16.msra.mxu0 0
  %708 = vmatprep.subr.bf16.mxu0 0
  %709 = vmatpush1.bf16.msra.mxu0 0
  %710 = vmatprep.subr.bf16.mxu0 0
  %711 = vmatpush1.bf16.msra.mxu0 0
  %712 = vmatprep.subr.bf16.mxu0 0
  %713 = vmatpush1.bf16.msra.mxu0 0
  %714 = vmatprep.subr.bf16.mxu0 0
  %715 = vmatpush1.bf16.msra.mxu0 0
  %716 = vmatprep.mubr.bf16.mxu0 0
  %717 = vmatmul.mubr.bf16.gmra.mrb[0].mxu0 %v682
  %v718 = vpop.f32.mrb[0].mxu0
  %v719 = vadd.f32 %v644, %v718
  %v720 = vpop.f32.mrb[0].mxu0
  %v721 = vpop.f32.mrb[0].mxu0
  %v722 = vpop.f32.mrb[0].mxu0
  %723 = vdwg.mxu0
  %v724 = vadd.f32 %v719, %v58
  %v725 = vxor.u32 %v724, 2147483648
  %v726 = vmul.f32 %v725, 1.442695
  %v727 = vpow.pop %v726
  %v728 = vadd.f32 %v727, 1.0
  %v729 = vrcp.pop %v728
  %v730 = vmul.f32 1.0, %v729
  %v731 = vtanh.pop %v724
  %v732 = vsel %vm64, %v731, %v730
  %v733 = vmul.f32 %v732, %v587
  %735 = vrot.lane.b32.xlu0 %v732, 64
  %v736 = vpop.permute.xlu0 %735
  %v738 = vmul.f32 %v732, %v736
  %740 = vrot.lane.b32.xlu0 %v738, 32
  %v741 = vpop.permute.xlu0 %740
  %v743 = vadd.f32 %v733, %v741
  %v744 = vtanh.pop %v743
  %746 = vrot.lane.b32.xlu0 %v744, 64
  %v747 = vpop.permute.xlu0 %746
  %v749 = vmul.f32 %v732, %v747
  %751 = vrot.lane.b32.xlu0 %v676, 32
  %v752 = vpop.permute.xlu0 %751
  %755 = vrot.lane.b32.xlu0 %v749, 64
  %v756 = vpop.permute.xlu0 %755
  %v758 = vsel %vm73, %v752, %v756
  %v759 = vpack.c.bf16 %v758, %v758
  %v761 = vsel %vm116, %v759, 0
  %763 = vmatprep.subr.bf16.mxu0 %v101
  %764 = vmatpush1.bf16.msra.mxu0 %v100
  %765 = vmatprep.subr.bf16.mxu0 %v103
  %766 = vmatpush1.bf16.msra.mxu0 %v102
  %767 = vmatprep.subr.bf16.mxu0 %v105
  %768 = vmatpush1.bf16.msra.mxu0 %v104
  %769 = vmatprep.subr.bf16.mxu0 %v107
  %770 = vmatpush1.bf16.msra.mxu0 %v106
  %771 = vmatprep.subr.bf16.mxu0 0
  %772 = vmatpush1.bf16.msra.mxu0 0
  %773 = vmatprep.subr.bf16.mxu0 0
  %774 = vmatpush1.bf16.msra.mxu0 0
  %775 = vmatprep.subr.bf16.mxu0 0
  %776 = vmatpush1.bf16.msra.mxu0 0
  %777 = vmatprep.subr.bf16.mxu0 0
  %778 = vmatpush1.bf16.msra.mxu0 0
  %779 = vmatprep.subr.bf16.mxu0 0
  %780 = vmatpush1.bf16.msra.mxu0 0
  %781 = vmatprep.subr.bf16.mxu0 0
  %782 = vmatpush1.bf16.msra.mxu0 0
  %783 = vmatprep.subr.bf16.mxu0 0
  %784 = vmatpush1.bf16.msra.mxu0 0
  %785 = vmatprep.subr.bf16.mxu0 0
  %786 = vmatpush1.bf16.msra.mxu0 0
  %787 = vmatprep.subr.bf16.mxu0 0
  %788 = vmatpush1.bf16.msra.mxu0 0
  %789 = vmatprep.subr.bf16.mxu0 0
  %790 = vmatpush1.bf16.msra.mxu0 0
  %791 = vmatprep.subr.bf16.mxu0 0
  %792 = vmatpush1.bf16.msra.mxu0 0
  %793 = vmatprep.subr.bf16.mxu0 0
  %794 = vmatpush1.bf16.msra.mxu0 0
  %795 = vmatprep.mubr.bf16.mxu0 0
  %796 = vmatmul.mubr.bf16.gmra.mrb[0].mxu0 %v761
  %v797 = vpop.f32.mrb[0].mxu0
  %v798 = vadd.f32 0.0, %v797
  %v799 = vpop.f32.mrb[0].mxu0
  %v800 = vadd.f32 0.0, %v799
  %v801 = vpop.f32.mrb[0].mxu0
  %v802 = vpop.f32.mrb[0].mxu0
  %803 = vdwg.mxu0
  %s804 = scalar_lea.vmem %s0, 16
  %v805 = vld [vmem:[%s804] sm:$0xf]
  %v806 = vunpack.c.l.bf16 %v805
  %v807 = vadd.f32 %v806, %v798
  %v808 = vxor.u32 %v807, 2147483648
  %v809 = vmul.f32 %v808, 1.442695
  %v810 = vpow.pop %v809
  %v811 = vadd.f32 %v810, 1.0
  %v812 = vrcp.pop %v811
  %v813 = vmul.f32 1.0, %v812
  %v814 = vtanh.pop %v807
  %v815 = vsel %vm64, %v814, %v813
  %v816 = vmul.f32 %v815, %v670
  %818 = vrot.lane.b32.xlu0 %v815, 64
  %v819 = vpop.permute.xlu0 %818
  %v821 = vmul.f32 %v815, %v819
  %823 = vrot.lane.b32.xlu0 %v821, 32
  %v824 = vpop.permute.xlu0 %823
  %v826 = vadd.f32 %v816, %v824
  %v827 = vtanh.pop %v826
  %829 = vrot.lane.b32.xlu0 %v827, 64
  %v830 = vpop.permute.xlu0 %829
  %v832 = vmul.f32 %v815, %v830
  %v833 = vpack.c.bf16 %v832, %v832
  %835 = vrot.lane.b32.xlu0 %v833, 32
  %v836 = vpop.permute.xlu0 %835
  %v838 = vsel %vm73, %v836, 0
  %840 = vmatprep.subr.bf16.mxu0 0
  %841 = vmatpush1.bf16.msra.mxu0 %v205
  %842 = vmatprep.subr.bf16.mxu0 0
  %843 = vmatpush1.bf16.msra.mxu0 %v206
  %844 = vmatprep.subr.bf16.mxu0 0
  %845 = vmatpush1.bf16.msra.mxu0 0
  %846 = vmatprep.subr.bf16.mxu0 0
  %847 = vmatpush1.bf16.msra.mxu0 0
  %848 = vmatprep.subr.bf16.mxu0 0
  %849 = vmatpush1.bf16.msra.mxu0 0
  %850 = vmatprep.subr.bf16.mxu0 0
  %851 = vmatpush1.bf16.msra.mxu0 0
  %852 = vmatprep.subr.bf16.mxu0 0
  %853 = vmatpush1.bf16.msra.mxu0 0
  %854 = vmatprep.subr.bf16.mxu0 0
  %855 = vmatpush1.bf16.msra.mxu0 0
  %856 = vmatprep.subr.bf16.mxu0 0
  %857 = vmatpush1.bf16.msra.mxu0 0
  %858 = vmatprep.subr.bf16.mxu0 0
  %859 = vmatpush1.bf16.msra.mxu0 0
  %860 = vmatprep.subr.bf16.mxu0 0
  %861 = vmatpush1.bf16.msra.mxu0 0
  %862 = vmatprep.subr.bf16.mxu0 0
  %863 = vmatpush1.bf16.msra.mxu0 0
  %864 = vmatprep.subr.bf16.mxu0 0
  %865 = vmatpush1.bf16.msra.mxu0 0
  %866 = vmatprep.subr.bf16.mxu0 0
  %867 = vmatpush1.bf16.msra.mxu0 0
  %868 = vmatprep.subr.bf16.mxu0 0
  %869 = vmatpush1.bf16.msra.mxu0 0
  %870 = vmatprep.subr.bf16.mxu0 0
  %871 = vmatpush1.bf16.msra.mxu0 0
  %872 = vmatprep.mubr.bf16.mxu0 0
  %873 = vmatmul.mubr.bf16.gmra.mrb[0].mxu0 %v838
  %v874 = vpop.f32.mrb[0].mxu0
  %v875 = vadd.f32 %v800, %v874
  %v876 = vpop.f32.mrb[0].mxu0
  %v877 = vpop.f32.mrb[0].mxu0
  %v878 = vpop.f32.mrb[0].mxu0
  %879 = vdwg.mxu0
  %v880 = vadd.f32 %v875, %v58
  %v881 = vxor.u32 %v880, 2147483648
  %v882 = vmul.f32 %v881, 1.442695
  %v883 = vpow.pop %v882
  %v884 = vadd.f32 %v883, 1.0
  %v885 = vrcp.pop %v884
  %v886 = vmul.f32 1.0, %v885
  %v887 = vtanh.pop %v880
  %v888 = vsel %vm64, %v887, %v886
  %v889 = vmul.f32 %v888, %v743
  %891 = vrot.lane.b32.xlu0 %v888, 64
  %v892 = vpop.permute.xlu0 %891
  %v894 = vmul.f32 %v888, %v892
  %896 = vrot.lane.b32.xlu0 %v894, 32
  %v897 = vpop.permute.xlu0 %896
  %v899 = vadd.f32 %v889, %v897
  %v900 = vtanh.pop %v899
  %902 = vrot.lane.b32.xlu0 %v900, 64
  %v903 = vpop.permute.xlu0 %902
  %v905 = vmul.f32 %v888, %v903
  %907 = vrot.lane.b32.xlu0 %v832, 32
  %v908 = vpop.permute.xlu0 %907
  %911 = vrot.lane.b32.xlu0 %v905, 64
  %v912 = vpop.permute.xlu0 %911
  %v914 = vsel %vm73, %v908, %v912
  %v915 = vpack.c.bf16 %v914, %v914
  %v917 = vsel %vm116, %v915, 0
  %919 = vmatprep.subr.bf16.mxu0 %v101
  %920 = vmatpush1.bf16.msra.mxu0 %v100
  %921 = vmatprep.subr.bf16.mxu0 %v103
  %922 = vmatpush1.bf16.msra.mxu0 %v102
  %923 = vmatprep.subr.bf16.mxu0 %v105
  %924 = vmatpush1.bf16.msra.mxu0 %v104
  %925 = vmatprep.subr.bf16.mxu0 %v107
  %926 = vmatpush1.bf16.msra.mxu0 %v106
  %927 = vmatprep.subr.bf16.mxu0 0
  %928 = vmatpush1.bf16.msra.mxu0 0
  %929 = vmatprep.subr.bf16.mxu0 0
  %930 = vmatpush1.bf16.msra.mxu0 0
  %931 = vmatprep.subr.bf16.mxu0 0
  %932 = vmatpush1.bf16.msra.mxu0 0
  %933 = vmatprep.subr.bf16.mxu0 0
  %934 = vmatpush1.bf16.msra.mxu0 0
  %935 = vmatprep.subr.bf16.mxu0 0
  %936 = vmatpush1.bf16.msra.mxu0 0
  %937 = vmatprep.subr.bf16.mxu0 0
  %938 = vmatpush1.bf16.msra.mxu0 0
  %939 = vmatprep.subr.bf16.mxu0 0
  %940 = vmatpush1.bf16.msra.mxu0 0
  %941 = vmatprep.subr.bf16.mxu0 0
  %942 = vmatpush1.bf16.msra.mxu0 0
  %943 = vmatprep.subr.bf16.mxu0 0
  %944 = vmatpush1.bf16.msra.mxu0 0
  %945 = vmatprep.subr.bf16.mxu0 0
  %946 = vmatpush1.bf16.msra.mxu0 0
  %947 = vmatprep.subr.bf16.mxu0 0
  %948 = vmatpush1.bf16.msra.mxu0 0
  %949 = vmatprep.subr.bf16.mxu0 0
  %950 = vmatpush1.bf16.msra.mxu0 0
  %951 = vmatprep.mubr.bf16.mxu0 0
  %952 = vmatmul.mubr.bf16.gmra.mrb[0].mxu0 %v917
  %v953 = vpop.f32.mrb[0].mxu0
  %v954 = vadd.f32 0.0, %v953
  %v955 = vpop.f32.mrb[0].mxu0
  %v956 = vadd.f32 0.0, %v955
  %v957 = vpop.f32.mrb[0].mxu0
  %v958 = vpop.f32.mrb[0].mxu0
  %959 = vdwg.mxu0
  %s960 = scalar_lea.vmem %s0, 20
  %v961 = vld [vmem:[%s960] sm:$0xf]
  %v962 = vunpack.c.l.bf16 %v961
  %v963 = vadd.f32 %v962, %v954
  %v964 = vxor.u32 %v963, 2147483648
  %v965 = vmul.f32 %v964, 1.442695
  %v966 = vpow.pop %v965
  %v967 = vadd.f32 %v966, 1.0
  %v968 = vrcp.pop %v967
  %v969 = vmul.f32 1.0, %v968
  %v970 = vtanh.pop %v963
  %v971 = vsel %vm64, %v970, %v969
  %v972 = vmul.f32 %v971, %v826
  %974 = vrot.lane.b32.xlu0 %v971, 64
  %v975 = vpop.permute.xlu0 %974
  %v977 = vmul.f32 %v971, %v975
  %979 = vrot.lane.b32.xlu0 %v977, 32
  %v980 = vpop.permute.xlu0 %979
  %v982 = vadd.f32 %v972, %v980
  %v983 = vtanh.pop %v982
  %985 = vrot.lane.b32.xlu0 %v983, 64
  %v986 = vpop.permute.xlu0 %985
  %v988 = vmul.f32 %v971, %v986
  %v989 = vpack.c.bf16 %v988, %v988
  %991 = vrot.lane.b32.xlu0 %v989, 32
  %v992 = vpop.permute.xlu0 %991
  %v994 = vsel %vm73, %v992, 0
  %996 = vmatprep.subr.bf16.mxu0 0
  %997 = vmatpush1.bf16.msra.mxu0 %v205
  %998 = vmatprep.subr.bf16.mxu0 0
  %999 = vmatpush1.bf16.msra.mxu0 %v206
  %1000 = vmatprep.subr.bf16.mxu0 0
  %1001 = vmatpush1.bf16.msra.mxu0 0
  %1002 = vmatprep.subr.bf16.mxu0 0
  %1003 = vmatpush1.bf16.msra.mxu0 0
  %1004 = vmatprep.subr.bf16.mxu0 0
  %1005 = vmatpush1.bf16.msra.mxu0 0
  %1006 = vmatprep.subr.bf16.mxu0 0
  %1007 = vmatpush1.bf16.msra.mxu0 0
  %1008 = vmatprep.subr.bf16.mxu0 0
  %1009 = vmatpush1.bf16.msra.mxu0 0
  %1010 = vmatprep.subr.bf16.mxu0 0
  %1011 = vmatpush1.bf16.msra.mxu0 0
  %1012 = vmatprep.subr.bf16.mxu0 0
  %1013 = vmatpush1.bf16.msra.mxu0 0
  %1014 = vmatprep.subr.bf16.mxu0 0
  %1015 = vmatpush1.bf16.msra.mxu0 0
  %1016 = vmatprep.subr.bf16.mxu0 0
  %1017 = vmatpush1.bf16.msra.mxu0 0
  %1018 = vmatprep.subr.bf16.mxu0 0
  %1019 = vmatpush1.bf16.msra.mxu0 0
  %1020 = vmatprep.subr.bf16.mxu0 0
  %1021 = vmatpush1.bf16.msra.mxu0 0
  %1022 = vmatprep.subr.bf16.mxu0 0
  %1023 = vmatpush1.bf16.msra.mxu0 0
  %1024 = vmatprep.subr.bf16.mxu0 0
  %1025 = vmatpush1.bf16.msra.mxu0 0
  %1026 = vmatprep.subr.bf16.mxu0 0
  %1027 = vmatpush1.bf16.msra.mxu0 0
  %1028 = vmatprep.mubr.bf16.mxu0 0
  %1029 = vmatmul.mubr.bf16.gmra.mrb[0].mxu0 %v994
  %v1030 = vpop.f32.mrb[0].mxu0
  %v1031 = vadd.f32 %v956, %v1030
  %v1032 = vpop.f32.mrb[0].mxu0
  %v1033 = vpop.f32.mrb[0].mxu0
  %v1034 = vpop.f32.mrb[0].mxu0
  %1035 = vdwg.mxu0
  %v1036 = vadd.f32 %v1031, %v58
  %v1037 = vxor.u32 %v1036, 2147483648
  %v1038 = vmul.f32 %v1037, 1.442695
  %v1039 = vpow.pop %v1038
  %v1040 = vadd.f32 %v1039, 1.0
  %v1041 = vrcp.pop %v1040
  %v1042 = vmul.f32 1.0, %v1041
  %v1043 = vtanh.pop %v1036
  %v1044 = vsel %vm64, %v1043, %v1042
  %v1045 = vmul.f32 %v1044, %v899
  %1047 = vrot.lane.b32.xlu0 %v1044, 64
  %v1048 = vpop.permute.xlu0 %1047
  %v1050 = vmul.f32 %v1044, %v1048
  %1052 = vrot.lane.b32.xlu0 %v1050, 32
  %v1053 = vpop.permute.xlu0 %1052
  %v1055 = vadd.f32 %v1045, %v1053
  %v1056 = vtanh.pop %v1055
  %1058 = vrot.lane.b32.xlu0 %v1056, 64
  %v1059 = vpop.permute.xlu0 %1058
  %v1061 = vmul.f32 %v1044, %v1059
  %1063 = vrot.lane.b32.xlu0 %v988, 32
  %v1064 = vpop.permute.xlu0 %1063
  %1067 = vrot.lane.b32.xlu0 %v1061, 64
  %v1068 = vpop.permute.xlu0 %1067
  %v1070 = vsel %vm73, %v1064, %v1068
  %v1071 = vpack.c.bf16 %v1070, %v1070
  %v1073 = vsel %vm116, %v1071, 0
  %1075 = vmatprep.subr.bf16.mxu0 %v101
  %1076 = vmatpush1.bf16.msra.mxu0 %v100
  %1077 = vmatprep.subr.bf16.mxu0 %v103
  %1078 = vmatpush1.bf16.msra.mxu0 %v102
  %1079 = vmatprep.subr.bf16.mxu0 %v105
  %1080 = vmatpush1.bf16.msra.mxu0 %v104
  %1081 = vmatprep.subr.bf16.mxu0 %v107
  %1082 = vmatpush1.bf16.msra.mxu0 %v106
  %1083 = vmatprep.subr.bf16.mxu0 0
  %1084 = vmatpush1.bf16.msra.mxu0 0
  %1085 = vmatprep.subr.bf16.mxu0 0
  %1086 = vmatpush1.bf16.msra.mxu0 0
  %1087 = vmatprep.subr.bf16.mxu0 0
  %1088 = vmatpush1.bf16.msra.mxu0 0
  %1089 = vmatprep.subr.bf16.mxu0 0
  %1090 = vmatpush1.bf16.msra.mxu0 0
  %1091 = vmatprep.subr.bf16.mxu0 0
  %1092 = vmatpush1.bf16.msra.mxu0 0
  %1093 = vmatprep.subr.bf16.mxu0 0
  %1094 = vmatpush1.bf16.msra.mxu0 0
  %1095 = vmatprep.subr.bf16.mxu0 0
  %1096 = vmatpush1.bf16.msra.mxu0 0
  %1097 = vmatprep.subr.bf16.mxu0 0
  %1098 = vmatpush1.bf16.msra.mxu0 0
  %1099 = vmatprep.subr.bf16.mxu0 0
  %1100 = vmatpush1.bf16.msra.mxu0 0
  %1101 = vmatprep.subr.bf16.mxu0 0
  %1102 = vmatpush1.bf16.msra.mxu0 0
  %1103 = vmatprep.subr.bf16.mxu0 0
  %1104 = vmatpush1.bf16.msra.mxu0 0
  %1105 = vmatprep.subr.bf16.mxu0 0
  %1106 = vmatpush1.bf16.msra.mxu0 0
  %1107 = vmatprep.mubr.bf16.mxu0 0
  %1108 = vmatmul.mubr.bf16.gmra.mrb[0].mxu0 %v1073
  %v1109 = vpop.f32.mrb[0].mxu0
  %v1110 = vadd.f32 0.0, %v1109
  %v1111 = vpop.f32.mrb[0].mxu0
  %v1112 = vadd.f32 0.0, %v1111
  %v1113 = vpop.f32.mrb[0].mxu0
  %v1114 = vpop.f32.mrb[0].mxu0
  %1115 = vdwg.mxu0
  %s1116 = scalar_lea.vmem %s0, 24
  %v1117 = vld [vmem:[%s1116] sm:$0xf]
  %v1118 = vunpack.c.l.bf16 %v1117
  %v1119 = vadd.f32 %v1118, %v1110
  %v1120 = vxor.u32 %v1119, 2147483648
  %v1121 = vmul.f32 %v1120, 1.442695
  %v1122 = vpow.pop %v1121
  %v1123 = vadd.f32 %v1122, 1.0
  %v1124 = vrcp.pop %v1123
  %v1125 = vmul.f32 1.0, %v1124
  %v1126 = vtanh.pop %v1119
  %v1127 = vsel %vm64, %v1126, %v1125
  %v1128 = vmul.f32 %v1127, %v982
  %1130 = vrot.lane.b32.xlu0 %v1127, 64
  %v1131 = vpop.permute.xlu0 %1130
  %v1133 = vmul.f32 %v1127, %v1131
  %1135 = vrot.lane.b32.xlu0 %v1133, 32
  %v1136 = vpop.permute.xlu0 %1135
  %v1138 = vadd.f32 %v1128, %v1136
  %v1139 = vtanh.pop %v1138
  %1141 = vrot.lane.b32.xlu0 %v1139, 64
  %v1142 = vpop.permute.xlu0 %1141
  %v1144 = vmul.f32 %v1127, %v1142
  %v1145 = vpack.c.bf16 %v1144, %v1144
  %1147 = vrot.lane.b32.xlu0 %v1145, 32
  %v1148 = vpop.permute.xlu0 %1147
  %v1150 = vsel %vm73, %v1148, 0
  %1152 = vmatprep.subr.bf16.mxu0 0
  %1153 = vmatpush1.bf16.msra.mxu0 %v205
  %1154 = vmatprep.subr.bf16.mxu0 0
  %1155 = vmatpush1.bf16.msra.mxu0 %v206
  %1156 = vmatprep.subr.bf16.mxu0 0
  %1157 = vmatpush1.bf16.msra.mxu0 0
  %1158 = vmatprep.subr.bf16.mxu0 0
  %1159 = vmatpush1.bf16.msra.mxu0 0
  %1160 = vmatprep.subr.bf16.mxu0 0
  %1161 = vmatpush1.bf16.msra.mxu0 0
  %1162 = vmatprep.subr.bf16.mxu0 0
  %1163 = vmatpush1.bf16.msra.mxu0 0
  %1164 = vmatprep.subr.bf16.mxu0 0
  %1165 = vmatpush1.bf16.msra.mxu0 0
  %1166 = vmatprep.subr.bf16.mxu0 0
  %1167 = vmatpush1.bf16.msra.mxu0 0
  %1168 = vmatprep.subr.bf16.mxu0 0
  %1169 = vmatpush1.bf16.msra.mxu0 0
  %1170 = vmatprep.subr.bf16.mxu0 0
  %1171 = vmatpush1.bf16.msra.mxu0 0
  %1172 = vmatprep.subr.bf16.mxu0 0
  %1173 = vmatpush1.bf16.msra.mxu0 0
  %1174 = vmatprep.subr.bf16.mxu0 0
  %1175 = vmatpush1.bf16.msra.mxu0 0
  %1176 = vmatprep.subr.bf16.mxu0 0
  %1177 = vmatpush1.bf16.msra.mxu0 0
  %1178 = vmatprep.subr.bf16.mxu0 0
  %1179 = vmatpush1.bf16.msra.mxu0 0
  %1180 = vmatprep.subr.bf16.mxu0 0
  %1181 = vmatpush1.bf16.msra.mxu0 0
  %1182 = vmatprep.subr.bf16.mxu0 0
  %1183 = vmatpush1.bf16.msra.mxu0 0
  %1184 = vmatprep.mubr.bf16.mxu0 0
  %1185 = vmatmul.mubr.bf16.gmra.mrb[0].mxu0 %v1150
  %v1186 = vpop.f32.mrb[0].mxu0
  %v1187 = vadd.f32 %v1112, %v1186
  %v1188 = vpop.f32.mrb[0].mxu0
  %v1189 = vpop.f32.mrb[0].mxu0
  %v1190 = vpop.f32.mrb[0].mxu0
  %1191 = vdwg.mxu0
  %v1192 = vadd.f32 %v1187, %v58
  %v1193 = vxor.u32 %v1192, 2147483648
  %v1194 = vmul.f32 %v1193, 1.442695
  %v1195 = vpow.pop %v1194
  %v1196 = vadd.f32 %v1195, 1.0
  %v1197 = vrcp.pop %v1196
  %v1198 = vmul.f32 1.0, %v1197
  %v1199 = vtanh.pop %v1192
  %v1200 = vsel %vm64, %v1199, %v1198
  %v1201 = vmul.f32 %v1200, %v1055
  %1203 = vrot.lane.b32.xlu0 %v1200, 64
  %v1204 = vpop.permute.xlu0 %1203
  %v1206 = vmul.f32 %v1200, %v1204
  %1208 = vrot.lane.b32.xlu0 %v1206, 32
  %v1209 = vpop.permute.xlu0 %1208
  %v1211 = vadd.f32 %v1201, %v1209
  %v1212 = vtanh.pop %v1211
  %1214 = vrot.lane.b32.xlu0 %v1212, 64
  %v1215 = vpop.permute.xlu0 %1214
  %v1217 = vmul.f32 %v1200, %v1215
  %1219 = vrot.lane.b32.xlu0 %v1144, 32
  %v1220 = vpop.permute.xlu0 %1219
  %1223 = vrot.lane.b32.xlu0 %v1217, 64
  %v1224 = vpop.permute.xlu0 %1223
  %v1226 = vsel %vm73, %v1220, %v1224
  %v1227 = vpack.c.bf16 %v1226, %v1226
  %v1229 = vsel %vm116, %v1227, 0
  %1231 = vmatprep.subr.bf16.mxu0 %v101
  %1232 = vmatpush1.bf16.msra.mxu0 %v100
  %1233 = vmatprep.subr.bf16.mxu0 %v103
  %1234 = vmatpush1.bf16.msra.mxu0 %v102
  %1235 = vmatprep.subr.bf16.mxu0 %v105
  %1236 = vmatpush1.bf16.msra.mxu0 %v104
  %1237 = vmatprep.subr.bf16.mxu0 %v107
  %1238 = vmatpush1.bf16.msra.mxu0 %v106
  %1239 = vmatprep.subr.bf16.mxu0 0
  %1240 = vmatpush1.bf16.msra.mxu0 0
  %1241 = vmatprep.subr.bf16.mxu0 0
  %1242 = vmatpush1.bf16.msra.mxu0 0
  %1243 = vmatprep.subr.bf16.mxu0 0
  %1244 = vmatpush1.bf16.msra.mxu0 0
  %1245 = vmatprep.subr.bf16.mxu0 0
  %1246 = vmatpush1.bf16.msra.mxu0 0
  %1247 = vmatprep.subr.bf16.mxu0 0
  %1248 = vmatpush1.bf16.msra.mxu0 0
  %1249 = vmatprep.subr.bf16.mxu0 0
  %1250 = vmatpush1.bf16.msra.mxu0 0
  %1251 = vmatprep.subr.bf16.mxu0 0
  %1252 = vmatpush1.bf16.msra.mxu0 0
  %1253 = vmatprep.subr.bf16.mxu0 0
  %1254 = vmatpush1.bf16.msra.mxu0 0
  %1255 = vmatprep.subr.bf16.mxu0 0
  %1256 = vmatpush1.bf16.msra.mxu0 0
  %1257 = vmatprep.subr.bf16.mxu0 0
  %1258 = vmatpush1.bf16.msra.mxu0 0
  %1259 = vmatprep.subr.bf16.mxu0 0
  %1260 = vmatpush1.bf16.msra.mxu0 0
  %1261 = vmatprep.subr.bf16.mxu0 0
  %1262 = vmatpush1.bf16.msra.mxu0 0
  %1263 = vmatprep.mubr.bf16.mxu0 0
  %1264 = vmatmul.mubr.bf16.gmra.mrb[0].mxu0 %v1229
  %v1265 = vpop.f32.mrb[0].mxu0
  %v1266 = vadd.f32 0.0, %v1265
  %v1267 = vpop.f32.mrb[0].mxu0
  %v1268 = vadd.f32 0.0, %v1267
  %v1269 = vpop.f32.mrb[0].mxu0
  %v1270 = vpop.f32.mrb[0].mxu0
  %1271 = vdwg.mxu0
  %s1272 = scalar_lea.vmem %s0, 28
  %v1273 = vld [vmem:[%s1272] sm:$0xf]
  %v1274 = vunpack.c.l.bf16 %v1273
  %v1275 = vadd.f32 %v1274, %v1266
  %v1276 = vxor.u32 %v1275, 2147483648
  %v1277 = vmul.f32 %v1276, 1.442695
  %v1278 = vpow.pop %v1277
  %v1279 = vadd.f32 %v1278, 1.0
  %v1280 = vrcp.pop %v1279
  %v1281 = vmul.f32 1.0, %v1280
  %v1282 = vtanh.pop %v1275
  %v1283 = vsel %vm64, %v1282, %v1281
  %v1284 = vmul.f32 %v1283, %v1138
  %1286 = vrot.lane.b32.xlu0 %v1283, 64
  %v1287 = vpop.permute.xlu0 %1286
  %v1289 = vmul.f32 %v1283, %v1287
  %1291 = vrot.lane.b32.xlu0 %v1289, 32
  %v1292 = vpop.permute.xlu0 %1291
  %v1294 = vadd.f32 %v1284, %v1292
  %v1295 = vtanh.pop %v1294
  %1297 = vrot.lane.b32.xlu0 %v1295, 64
  %v1298 = vpop.permute.xlu0 %1297
  %v1300 = vmul.f32 %v1283, %v1298
  %v1301 = vpack.c.bf16 %v1300, %v1300
  %1303 = vrot.lane.b32.xlu0 %v1301, 32
  %v1304 = vpop.permute.xlu0 %1303
  %v1306 = vsel %vm73, %v1304, 0
  %1308 = vmatprep.subr.bf16.mxu0 0
  %1309 = vmatpush1.bf16.msra.mxu0 %v205
  %1310 = vmatprep.subr.bf16.mxu0 0
  %1311 = vmatpush1.bf16.msra.mxu0 %v206
  %1312 = vmatprep.subr.bf16.mxu0 0
  %1313 = vmatpush1.bf16.msra.mxu0 0
  %1314 = vmatprep.subr.bf16.mxu0 0
  %1315 = vmatpush1.bf16.msra.mxu0 0
  %1316 = vmatprep.subr.bf16.mxu0 0
  %1317 = vmatpush1.bf16.msra.mxu0 0
  %1318 = vmatprep.subr.bf16.mxu0 0
  %1319 = vmatpush1.bf16.msra.mxu0 0
  %1320 = vmatprep.subr.bf16.mxu0 0
  %1321 = vmatpush1.bf16.msra.mxu0 0
  %1322 = vmatprep.subr.bf16.mxu0 0
  %1323 = vmatpush1.bf16.msra.mxu0 0
  %1324 = vmatprep.subr.bf16.mxu0 0
  %1325 = vmatpush1.bf16.msra.mxu0 0
  %1326 = vmatprep.subr.bf16.mxu0 0
  %1327 = vmatpush1.bf16.msra.mxu0 0
  %1328 = vmatprep.subr.bf16.mxu0 0
  %1329 = vmatpush1.bf16.msra.mxu0 0
  %1330 = vmatprep.subr.bf16.mxu0 0
  %1331 = vmatpush1.bf16.msra.mxu0 0
  %1332 = vmatprep.subr.bf16.mxu0 0
  %1333 = vmatpush1.bf16.msra.mxu0 0
  %1334 = vmatprep.subr.bf16.mxu0 0
  %1335 = vmatpush1.bf16.msra.mxu0 0
  %1336 = vmatprep.subr.bf16.mxu0 0
  %1337 = vmatpush1.bf16.msra.mxu0 0
  %1338 = vmatprep.subr.bf16.mxu0 0
  %1339 = vmatpush1.bf16.msra.mxu0 0
  %1340 = vmatprep.mubr.bf16.mxu0 0
  %1341 = vmatmul.mubr.bf16.gmra.mrb[0].mxu0 %v1306
  %v1342 = vpop.f32.mrb[0].mxu0
  %v1343 = vadd.f32 %v1268, %v1342
  %v1344 = vpop.f32.mrb[0].mxu0
  %v1345 = vpop.f32.mrb[0].mxu0
  %v1346 = vpop.f32.mrb[0].mxu0
  %1347 = vdwg.mxu0
  %v1348 = vadd.f32 %v1343, %v58
  %v1349 = vxor.u32 %v1348, 2147483648
  %v1350 = vmul.f32 %v1349, 1.442695
  %v1351 = vpow.pop %v1350
  %v1352 = vadd.f32 %v1351, 1.0
  %v1353 = vrcp.pop %v1352
  %v1354 = vmul.f32 1.0, %v1353
  %v1355 = vtanh.pop %v1348
  %v1356 = vsel %vm64, %v1355, %v1354
  %v1357 = vmul.f32 %v1356, %v1211
  %1359 = vrot.lane.b32.xlu0 %v1356, 64
  %v1360 = vpop.permute.xlu0 %1359
  %v1362 = vmul.f32 %v1356, %v1360
  %1364 = vrot.lane.b32.xlu0 %v1362, 32
  %v1365 = vpop.permute.xlu0 %1364
  %v1367 = vadd.f32 %v1357, %v1365
  %v1368 = vtanh.pop %v1367
  %1370 = vrot.lane.b32.xlu0 %v1368, 64
  %v1371 = vpop.permute.xlu0 %1370
  %v1373 = vmul.f32 %v1356, %v1371
  %1375 = vrot.lane.b32.xlu0 %v1300, 32
  %v1376 = vpop.permute.xlu0 %1375
  %1378 = vst.msk [vmem:[#allocation2] sm:$0xff] %vm73, %v1376
  %1380 = vrot.lane.b32.xlu0 %v1294, 96
  %v1381 = vpop.permute.xlu0 %1380
  %1383 = vst.msk [vmem:[#allocation3] sm:$0xff] %vm73, %v1381
  %1385 = vrot.lane.b32.xlu0 %v1373, 32
  %v1386 = vpop.permute.xlu0 %1385
  %1388 = vst.msk [vmem:[#allocation4] sm:$0xff] %vm73, %v1386
  %1390 = vrot.lane.b32.xlu0 %v1367, 96
  %v1391 = vpop.permute.xlu0 %1390
  %1393 = vst.msk [vmem:[#allocation5] sm:$0xff] %vm73, %v1391
  // Predicated region
  $region38: #{sohlstm_forward.1} parent=0 // pred_check
    %p1394 = pneg %p32
  $region39: #{sohlstm_forward.1} parent=0 // pred_check_branch
    %1396 = sbr.rel (%p1394) target = $region41
  $region40: #{sohlstm_forward.1} parent=0 // pred_region
    %v1397 = vld [vmem:[%s4] sm:$0xff]
    %v1398 = vld [vmem:[%s4 + $0x8] sm:$0xff]
    %v1399 = vld [vmem:[%s4 + $0x10] sm:$0xff]
    %v1400 = vld [vmem:[%s4 + $0x18] sm:$0xff]
    %v1401 = vld [vmem:[%s5] sm:$0x1]
    %v1403 = vlaneseq
    %v1404 = vshrl.u32 %v1403, 7
    %v1405 = vsub.s32 0, %v1404
    %v1406 = vrot.slane %v1401, %v1405
    %v1408 = vsel %vm73, %v1386, 0
    %1410 = vmatprep.subr.mxu0 0.0
    %1411 = vmatpush1.msra.mxu0 %v1397
    %1412 = vmatprep.subr.mxu0 0.0
    %1413 = vmatpush1.msra.mxu0 %v1398
    %1414 = vmatprep.subr.mxu0 0.0
    %1415 = vmatpush1.msra.mxu0 %v1399
    %1416 = vmatprep.subr.mxu0 0.0
    %1417 = vmatpush1.msra.mxu0 %v1400
    %1418 = vmatprep.subr.mxu0 0.0
    %1419 = vmatpush1.msra.mxu0 0.0
    %1420 = vmatprep.subr.mxu0 0.0
    %1421 = vmatpush1.msra.mxu0 0.0
    %1422 = vmatprep.subr.mxu0 0.0
    %1423 = vmatpush1.msra.mxu0 0.0
    %1424 = vmatprep.subr.mxu0 0.0
    %1425 = vmatpush1.msra.mxu0 0.0
    %1426 = vmatprep.subr.mxu0 0.0
    %1427 = vmatpush1.msra.mxu0 0.0
    %1428 = vmatprep.subr.mxu0 0.0
    %1429 = vmatpush1.msra.mxu0 0.0
    %1430 = vmatprep.subr.mxu0 0.0
    %1431 = vmatpush1.msra.mxu0 0.0
    %1432 = vmatprep.subr.mxu0 0.0
    %1433 = vmatpush1.msra.mxu0 0.0
    %1434 = vmatprep.subr.mxu0 0.0
    %1435 = vmatpush1.msra.mxu0 0.0
    %1436 = vmatprep.subr.mxu0 0.0
    %1437 = vmatpush1.msra.mxu0 0.0
    %1438 = vmatprep.subr.mxu0 0.0
    %1439 = vmatpush1.msra.mxu0 0.0
    %1440 = vmatprep.subr.mxu0 0.0
    %1441 = vmatpush1.msra.mxu0 0.0
    %1442 = vmatprep.subr.mxu0 0.0
    %1443 = vmatpush1.msra.mxu0 0.0
    %1444 = vmatprep.subr.mxu0 0.0
    %1445 = vmatpush1.msra.mxu0 0.0
    %1446 = vmatprep.subr.mxu0 0.0
    %1447 = vmatpush1.msra.mxu0 0.0
    %1448 = vmatprep.subr.mxu0 0.0
    %1449 = vmatpush1.msra.mxu0 0.0
    %1450 = vmatprep.subr.mxu0 0.0
    %1451 = vmatpush1.msra.mxu0 0.0
    %1452 = vmatprep.subr.mxu0 0.0
    %1453 = vmatpush1.msra.mxu0 0.0
    %1454 = vmatprep.subr.mxu0 0.0
    %1455 = vmatpush1.msra.mxu0 0.0
    %1456 = vmatprep.subr.mxu0 0.0
    %1457 = vmatpush1.msra.mxu0 0.0
    %1458 = vmatprep.subr.mxu0 0.0
    %1459 = vmatpush1.msra.mxu0 0.0
    %1460 = vmatprep.subr.mxu0 0.0
    %1461 = vmatpush1.msra.mxu0 0.0
    %1462 = vmatprep.subr.mxu0 0.0
    %1463 = vmatpush1.msra.mxu0 0.0
    %1464 = vmatprep.subr.mxu0 0.0
    %1465 = vmatpush1.msra.mxu0 0.0
    %1466 = vmatprep.subr.mxu0 0.0
    %1467 = vmatpush1.msra.mxu0 0.0
    %1468 = vmatprep.subr.mxu0 0.0
    %1469 = vmatpush1.msra.mxu0 0.0
    %1470 = vmatprep.subr.mxu0 0.0
    %1471 = vmatpush1.msra.mxu0 0.0
    %1472 = vmatprep.subr.mxu0 0.0
    %1473 = vmatpush1.msra.mxu0 0.0
    %1474 = vmatprep.mubr.f32.mxu0 0.0
    %1475 = vmatmul.mubr.f32.gmra.mrb[0].mxu0 %v1408
    %v1476 = vpop.f32.mrb[0].mxu0
    %v1477 = vadd.f32 %v1406, %v1476
    %v1478 = vpop.f32.mrb[0].mxu0
    %1479 = vdwg.mxu0
    %vm1480 = vcmp.gt.f32.partialorder %v1477, 0.0
    %v1481 = vmul.f32 %v1477, 0.01
    %v1482 = vsel %vm1480, %v1477, %v1481
    %v1483 = vld [vmem:[%s6] sm:$0xff]
    %v1484 = vld [vmem:[%s6 + $0x8] sm:$0xff]
    %v1485 = vld [vmem:[#allocation6] sm:$0x1]
    %v1487 = vlaneseq
    %v1488 = vshrl.u32 %v1487, 7
    %v1489 = vsub.s32 0, %v1488
    %v1490 = vrot.slane %v1485, %v1489
    %vm1492 = vcmask 130048
    %v1494 = vsel %vm1492, %v1482, 0
    %1496 = vmatprep.subr.mxu0 0.0
    %1497 = vmatpush1.msra.mxu0 %v1483
    %1498 = vmatprep.subr.mxu0 0.0
    %1499 = vmatpush1.msra.mxu0 %v1484
    %1500 = vmatprep.subr.mxu0 0.0
    %1501 = vmatpush1.msra.mxu0 0.0
    %1502 = vmatprep.subr.mxu0 0.0
    %1503 = vmatpush1.msra.mxu0 0.0
    %1504 = vmatprep.subr.mxu0 0.0
    %1505 = vmatpush1.msra.mxu0 0.0
    %1506 = vmatprep.subr.mxu0 0.0
    %1507 = vmatpush1.msra.mxu0 0.0
    %1508 = vmatprep.subr.mxu0 0.0
    %1509 = vmatpush1.msra.mxu0 0.0
    %1510 = vmatprep.subr.mxu0 0.0
    %1511 = vmatpush1.msra.mxu0 0.0
    %1512 = vmatprep.subr.mxu0 0.0
    %1513 = vmatpush1.msra.mxu0 0.0
    %1514 = vmatprep.subr.mxu0 0.0
    %1515 = vmatpush1.msra.mxu0 0.0
    %1516 = vmatprep.subr.mxu0 0.0
    %1517 = vmatpush1.msra.mxu0 0.0
    %1518 = vmatprep.subr.mxu0 0.0
    %1519 = vmatpush1.msra.mxu0 0.0
    %1520 = vmatprep.subr.mxu0 0.0
    %1521 = vmatpush1.msra.mxu0 0.0
    %1522 = vmatprep.subr.mxu0 0.0
    %1523 = vmatpush1.msra.mxu0 0.0
    %1524 = vmatprep.subr.mxu0 0.0
    %1525 = vmatpush1.msra.mxu0 0.0
    %1526 = vmatprep.subr.mxu0 0.0
    %1527 = vmatpush1.msra.mxu0 0.0
    %1528 = vmatprep.subr.mxu0 0.0
    %1529 = vmatpush1.msra.mxu0 0.0
    %1530 = vmatprep.subr.mxu0 0.0
    %1531 = vmatpush1.msra.mxu0 0.0
    %1532 = vmatprep.subr.mxu0 0.0
    %1533 = vmatpush1.msra.mxu0 0.0
    %1534 = vmatprep.subr.mxu0 0.0
    %1535 = vmatpush1.msra.mxu0 0.0
    %1536 = vmatprep.subr.mxu0 0.0
    %1537 = vmatpush1.msra.mxu0 0.0
    %1538 = vmatprep.subr.mxu0 0.0
    %1539 = vmatpush1.msra.mxu0 0.0
    %1540 = vmatprep.subr.mxu0 0.0
    %1541 = vmatpush1.msra.mxu0 0.0
    %1542 = vmatprep.subr.mxu0 0.0
    %1543 = vmatpush1.msra.mxu0 0.0
    %1544 = vmatprep.subr.mxu0 0.0
    %1545 = vmatpush1.msra.mxu0 0.0
    %1546 = vmatprep.subr.mxu0 0.0
    %1547 = vmatpush1.msra.mxu0 0.0
    %1548 = vmatprep.subr.mxu0 0.0
    %1549 = vmatpush1.msra.mxu0 0.0
    %1550 = vmatprep.subr.mxu0 0.0
    %1551 = vmatpush1.msra.mxu0 0.0
    %1552 = vmatprep.subr.mxu0 0.0
    %1553 = vmatpush1.msra.mxu0 0.0
    %1554 = vmatprep.subr.mxu0 0.0
    %1555 = vmatpush1.msra.mxu0 0.0
    %1556 = vmatprep.subr.mxu0 0.0
    %1557 = vmatpush1.msra.mxu0 0.0
    %1558 = vmatprep.subr.mxu0 0.0
    %1559 = vmatpush1.msra.mxu0 0.0
    %1560 = vmatprep.mubr.f32.mxu0 0.0
    %1561 = vmatmul.mubr.f32.gmra.mrb[0].mxu0 %v1494
    %v1562 = vpop.f32.mrb[0].mxu0
    %v1563 = vadd.f32 %v1490, %v1562
    %v1564 = vpop.f32.mrb[0].mxu0
    %1565 = vdwg.mxu0
    %vm1566 = vcmask 7168
    %1567 = vst.msk [vmem:[%s8] sm:$0xff] %vm1566, %v1563
  $region41: #{sohlstm_forward.1} parent=0 // pred_fallthru
    _
  // Predicated region
  $region42: #{sohlstm_forward.1} parent=0 // pred_check
    _
  $region43: #{sohlstm_forward.1} parent=0 // pred_check_branch
    %1569 = sbr.rel (0) target = $region45
  $region44: #{sohlstm_forward.1} parent=0 // pred_region
    _
  $region45: #{sohlstm_forward.1} parent=0 // pred_fallthru
    _
  // Predicated region
  $region46: #{sohlstm_forward.1} parent=0 // pred_check
    _
  $region47: #{sohlstm_forward.1} parent=0 // pred_check_branch
    %1571 = sbr.rel (0) target = $region49
  $region48: #{sohlstm_forward.1} parent=0 // pred_region
    _
  $region49: #{sohlstm_forward.1} parent=0 // pred_fallthru
    _

</llo_original>
